<compile_context>
chip_gen: v5e
topology: v5e:2x2
jax: 0.10.0
libtpu: 0.0.40
codegen_flags: <defaults>
</compile_context>

<pallas_src>
import functools

import jax
import jax.numpy as jnp
import numpy as np
from jax.experimental import pallas as pl
from jax.experimental.pallas import tpu as pltpu

ANCHORS = [[[116, 90], [156, 198], [373, 326]],
           [[30, 61], [62, 45], [59, 119]],
           [[10, 13], [16, 30], [33, 23]]]
INPUT_SIZE = 416


# ----------------------------------------------------------------------------- kernel
def _fast_recip(x):
    """EUP approx reciprocal + one Newton step (~2^-22 rel. error).  Moves the divide
    off the VPU while keeping argmax / 0.5-threshold decisions stable vs an exact
    divide oracle."""
    r = pl.reciprocal(x, approx=True)
    return r * (2.0 - x * r)


def _fused_kernel(gt_ref, pred_ref, meta_ref, raw4_ref, dec_ref, loss_ref, *,
                  box_rate, obj_rate, noobj_rate, class_rate):
    """One batch element per grid step.  Decodes the raw predictions in-kernel (and
    writes them out), then computes the per-image YOLO loss with all T ground truths
    on the sublane axis and all N boxes on the lane axis.  Positive rows are gathered
    with a single one-hot MXU matmul."""
    p = pred_ref[0]                      # (D, N) raw predictions, decode ordering
    m = meta_ref[...]                    # (8, N): [grid_x, grid_y, anchor_w, anchor_h, scale, 0, 0, 0]
    raw4 = raw4_ref[0]                   # (4, N) raw box rows, reference-quirk ordering
    g = gt_ref[0]                        # (T, 8): [x, y, w, h, class, 0, 0, 0]
    D, N = p.shape
    T = g.shape[0]

    # ---- decode (fused).  Sigmoid kept exact so decoded coords match the oracle. ----
    s = m[4:5]                                               # (1, N)
    xy = (1.0 / (1.0 + jnp.exp(-p[0:2])) + m[0:2]) * s       # rows 0,1: centres
    wh = jnp.exp(p[2:4]) * m[2:4] * s                        # rows 2,3: sizes
    rest = 1.0 / (1.0 + jnp.exp(-p[4:]))                     # rows 4+: conf + class probs
    dec_ref[0, 0:2] = xy                                     # row-slice stores, no concat temp
    dec_ref[0, 2:4] = wh
    dec_ref[0, 4:] = rest

    # ---- ground-truth-invariant per-box rows (computed once per image) ----
    xa, ya = xy[0:1], xy[1:2]            # (1, N)
    wa, ha = wh[0:1], wh[1:2]
    conf = rest[0:1]
    x2a, y2a = xa + wa, ya + ha
    area_a = wa * ha
    log_noobj = jnp.log(1.0 - conf + 1e-9)

    g0, g1, g2, g3 = g[:, 0:1], g[:, 1:2], g[:, 2:3], g[:, 3:4]   # (T, 1)
    gcls = g[:, 4:5]

    # ---- IoU of every predicted box against every ground truth: (T, N) ----
    x_left = jnp.maximum(xa, g0)
    y_top = jnp.maximum(ya, g1)
    x_right = jnp.minimum(x2a, g0 + g2)
    y_bottom = jnp.minimum(y2a, g1 + g3)
    inter = jnp.maximum(x_right - x_left, 0.0) * jnp.maximum(y_bottom - y_top, 0.0)
    union = area_a + g2 * g3 - inter
    iou = inter * _fast_recip(union)

    # First-occurrence argmax along the lane axis -> one-hot gather rows.
    lane = jax.lax.broadcasted_iota(jnp.int32, (1, N), 1)          # (1, N) iota, broadcast later
    max_iou = jnp.max(iou, axis=1, keepdims=True)                  # (T, 1)
    pos_idx = jnp.min(jnp.where(iou == max_iou, lane, N), axis=1, keepdims=True)
    onehot = (lane == pos_idx).astype(jnp.float32)                 # (T, N)

    # No-object term: masked mean of the hoisted log(1 - conf) row.
    neg = (iou < 0.5).astype(jnp.float32)
    noobj = (jnp.sum(neg * log_noobj, axis=1, keepdims=True)
             * _fast_recip(jnp.sum(neg, axis=1, keepdims=True)))   # (T, 1)

    # Single one-hot MXU gather over concat([raw box rows, decoded conf/class rows]):
    # (T, N) . (D, N)^T -> (T, D).  Columns 0:4 = raw box, 4 = conf, 5: = class probs.
    src = jnp.concatenate([raw4, rest], axis=0)                    # (D, N)
    dims = (((1,), (1,)), ((), ()))
    pos = jax.lax.dot_general(onehot, src, dims, preferred_element_type=jnp.float32)

    col = jax.lax.broadcasted_iota(jnp.int32, (T, D), 1)
    gt_box = jnp.where(col == 0, g0,
             jnp.where(col == 1, g1,
             jnp.where(col == 2, g2,
             jnp.where(col == 3, g3, 0.0))))
    mse = jnp.sum(jnp.where(col < 4, (pos - gt_box) ** 2, 0.0),
                  axis=1, keepdims=True) * 0.25                    # (T, 1)

    pos_conf = jnp.sum(jnp.where(col == 4, pos, 0.0), axis=1, keepdims=True)
    obj_term = jnp.log(pos_conf + 1e-9)                            # (T, 1)

    cls_mask = col >= 5
    mx = jnp.max(jnp.where(cls_mask, pos, -jnp.inf), axis=1, keepdims=True)
    lse = mx + jnp.log(jnp.sum(jnp.exp(jnp.where(cls_mask, pos - mx, -jnp.inf)),
                               axis=1, keepdims=True))
    tgt_col = 5 + gcls.astype(jnp.int32)
    tgt_logit = jnp.sum(jnp.where(col == tgt_col, pos, 0.0), axis=1, keepdims=True)
    ce = lse - tgt_logit                                           # (T, 1)

    per_gt = (box_rate * mse - obj_rate * obj_term
              - noobj_rate * noobj - class_rate * ce)              # (T, 1)
    total = jnp.sum(per_gt)
    loss_ref[...] = jnp.broadcast_to(total, loss_ref.shape).astype(loss_ref.dtype)


# -------------------------------------------------------------------------------- glue
def _build_decode_inputs(batch_x, input_size=INPUT_SIZE):
    """Raw predictions in transposed (B, D, N) layout and a lane-dense (8, N) meta."""
    B = batch_x[0].shape[0]
    D = batch_x[0].shape[1] // 3
    preds, metas = [], []
    for i, inp in enumerate(batch_x):
        W = inp.shape[-1]
        s = input_size / W
        # (B, 3, D, W, W) -> (B, D, 3, W, W) -> (B, D, 3*W*W); box ordering (anchor, gy, gx),
        # same as the reference (B, 3, W, W, D) flatten.
        p = (inp.reshape(B, 3, D, W, W)
                .transpose(0, 2, 1, 3, 4)
                .reshape(B, D, 3 * W * W))
        preds.append(p)
        sa = [[float(aw // s), float(ah // s)] for aw, ah in ANCHORS[i]]   # matches torch `//`
        gx = jnp.broadcast_to(jnp.arange(W, dtype=jnp.float32)[None, None, :], (3, W, W)).reshape(-1)
        gy = jnp.broadcast_to(jnp.arange(W, dtype=jnp.float32)[None, :, None], (3, W, W)).reshape(-1)
        awv = jnp.broadcast_to(jnp.array([a[0] for a in sa], jnp.float32)[:, None, None], (3, W, W)).reshape(-1)
        ahv = jnp.broadcast_to(jnp.array([a[1] for a in sa], jnp.float32)[:, None, None], (3, W, W)).reshape(-1)
        sv = jnp.full_like(gx, s)
        z = jnp.zeros_like(gx)
        metas.append(jnp.stack([gx, gy, awv, ahv, sv, z, z, z], axis=0))   # (8, n_i)
    return jnp.concatenate(preds, axis=2), jnp.concatenate(metas, axis=1)


def _build_raw4(batch_x):
    """Reference quirk reproduced exactly: ALL scales are viewed with width1 before
    flattening.  Only the 4 raw box columns are kept (the only raw values the loss uses)."""
    B = batch_x[0].shape[0]
    D = batch_x[0].shape[1] // 3
    w1 = batch_x[0].shape[-1]
    rows = [x.reshape(B, 3, -1, w1, w1).transpose(0, 1, 3, 4, 2).reshape(B, -1, D)
            for x in batch_x]
    return jnp.concatenate(rows, axis=1)[..., :4]              # (B, N, 4)


def _fused_call(batch_y, pred_dn, meta, raw4_dn, rates):
    B, D, N = pred_dn.shape
    T = batch_y.shape[1]
    gts8 = jnp.concatenate([batch_y.astype(jnp.float32),
                            jnp.zeros((B, T, 3), jnp.float32)], axis=-1)   # (B, T, 8)
    kernel = functools.partial(_fused_kernel, box_rate=rates[0], obj_rate=rates[1],
                               noobj_rate=rates[2], class_rate=rates[3])
    # TODO(synk): for production sizes (N ~ 10k, D = 85, T ~ 64) tile the N axis with an
    # "arbitrary" grid axis + online max/argmax + partial noobj accumulators so full-N
    # blocks never exceed v7x's 64 MiB VMEM, and add a second parallel axis so both
    # v7x TensorCores get work when B is small/odd.
    dec_dn, tiles = pl.pallas_call(
        kernel,
        out_shape=(jax.ShapeDtypeStruct((B, D, N), jnp.float32),   # decoded (transposed)
                   jax.ShapeDtypeStruct((B, 8, 128), jnp.float32)),  # per-image loss tile
        grid=(B,),
        in_specs=[pl.BlockSpec((1, T, 8), lambda b: (b, 0, 0)),    # ground truths
                  pl.BlockSpec((1, D, N), lambda b: (b, 0, 0)),    # raw preds (decode order)
                  pl.BlockSpec((8, N), lambda b: (0, 0)),          # grid/anchor/scale meta
                  pl.BlockSpec((1, 4, N), lambda b: (b, 0, 0))],   # raw box rows (quirk order)
        out_specs=(pl.BlockSpec((1, D, N), lambda b: (b, 0, 0)),
                   pl.BlockSpec((1, 8, 128), lambda b: (b, 0, 0))),
        compiler_params=pltpu.CompilerParams(
            dimension_semantics=("parallel",),
            vmem_limit_bytes=32 * 1024 * 1024),   # safe on v7x's 64 MiB physical VMEM
    )(gts8, pred_dn, meta, raw4_dn)
    return dec_dn, jnp.sum(tiles[:, 0, 0])


def yolo_loss(batch_x, batch_y, box=1.0, obj=1.0, noobj=1.0, classes=1.0):
    """Equivalent of YoloLoss.forward.  batch_x: list of 3 NCHW arrays, batch_y: (B, T, 5)."""
    pred_dn, meta = _build_decode_inputs(batch_x)
    raw4 = _build_raw4(batch_x)                       # (B, N, 4): slice BEFORE the transpose
    raw4_dn = jnp.transpose(raw4, (0, 2, 1))          # (B, 4, N) lane-dense for the kernel
    dec_dn, loss = _fused_call(batch_y, pred_dn, meta, raw4_dn, (box, obj, noobj, classes))
    decoded = jnp.transpose(dec_dn, (0, 2, 1))        # (B, N, D) only for caller / checks
    return loss, (decoded, raw4)
# TODO(synk): variable-length per-image ground-truth lists are fixed to a dense (B, T, 5) tensor.


# ---------------------------------------------------------------------- pure-JAX oracle
def _reference_decode(batch_x, input_size=INPUT_SIZE):
    B = batch_x[0].shape[0]
    img_dim = batch_x[0].shape[1] // 3
    outs = []
    for i, inp in enumerate(batch_x):
        W = inp.shape[-1]
        s = input_size / W
        p = inp.reshape(B, 3, -1, W, W).transpose(0, 1, 3, 4, 2)
        sig = 1.0 / (1.0 + jnp.exp(-p))
        gx = jnp.arange(W, dtype=jnp.float32)[None, None, None, :]
        gy = jnp.arange(W, dtype=jnp.float32)[None, None, :, None]
        sa = [[float(aw // s), float(ah // s)] for aw, ah in ANCHORS[i]]
        awv = jnp.array([a[0] for a in sa], jnp.float32)[None, :, None, None]
        ahv = jnp.array([a[1] for a in sa], jnp.float32)[None, :, None, None]
        pb0 = (sig[..., 0] + gx) * s
        pb1 = (sig[..., 1] + gy) * s
        pb2 = jnp.exp(p[..., 2]) * awv * s
        pb3 = jnp.exp(p[..., 3]) * ahv * s
        dec = jnp.concatenate([pb0[..., None], pb1[..., None], pb2[..., None],
                               pb3[..., None], sig[..., 4:]], axis=-1)
        outs.append(dec.reshape(B, -1, img_dim))
    return jnp.concatenate(outs, axis=1)


def _reference_loss(decoded, raw4, gts, box, obj, noobj, classes):
    total = jnp.float32(0.0)
    B, T = gts.shape[0], gts.shape[1]
    for b in range(B):
        d_x, x4 = decoded[b], raw4[b]
        for t in range(T):
            g = gts[b, t]
            xa, ya, wa, ha = d_x[:, 0], d_x[:, 1], d_x[:, 2], d_x[:, 3]
            x_left = jnp.maximum(xa, g[0]); y_top = jnp.maximum(ya, g[1])
            x_right = jnp.minimum(xa + wa, g[0] + g[2]); y_bottom = jnp.minimum(ya + ha, g[1] + g[3])
            inter = jnp.maximum(x_right - x_left, 0.0) * jnp.maximum(y_bottom - y_top, 0.0)
            iou = inter / (wa * ha + g[2] * g[3] - inter)
            pos = jnp.argmax(iou)
            neg = iou < 0.5
            mse = jnp.mean((x4[pos] - g[:4]) ** 2)
            obj_t = jnp.log(d_x[pos, 4] + 1e-9)
            noobj_t = jnp.sum(jnp.where(neg, jnp.log(1.0 - d_x[:, 4] + 1e-9), 0.0)) / jnp.sum(neg)
            logits = d_x[pos, 5:]
            mx = jnp.max(logits)
            ce = mx + jnp.log(jnp.sum(jnp.exp(logits - mx))) - logits[g[4].astype(jnp.int32)]
            total = total + box * mse - obj * obj_t - noobj * noobj_t - classes * ce
    return total


if __name__ == "__main__":
    key = jax.random.PRNGKey(0)
    k0, k1, k2, k3, k4 = jax.random.split(key, 5)
    B, C = 2, 3
    D = 5 + C
    # Three detection scales (NCHW), smallest spatial first (matches anchor ordering).
    batch_x = [
        jax.random.normal(k0, (B, 3 * D, 4, 4), jnp.float32),
        jax.random.normal(k1, (B, 3 * D, 8, 8), jnp.float32),
        jax.random.normal(k2, (B, 3 * D, 16, 16), jnp.float32),
    ]
    T = 2
    gt_box = jax.random.uniform(k3, (B, T, 4), jnp.float32, minval=10.0, maxval=120.0)
    gt_cls = jax.random.randint(k4, (B, T, 1), 0, C).astype(jnp.float32)
    batch_y = jnp.concatenate([gt_box, gt_cls], axis=-1)        # (B, T, 5): x, y, w, h, class

    loss, (decoded, raw4) = jax.jit(yolo_loss)(batch_x, batch_y)
    loss = jax.block_until_ready(loss)

    # Correctness check against a pure-JAX re-implementation of the PyTorch semantics.
    dec_ref = _reference_decode(batch_x)
    np.testing.assert_allclose(np.asarray(decoded), np.asarray(dec_ref), rtol=1e-4, atol=1e-4)
    loss_ref = _reference_loss(dec_ref, raw4, batch_y, 1.0, 1.0, 1.0, 1.0)
    np.testing.assert_allclose(float(loss), float(loss_ref), rtol=1e-3)

    print("KERNEL_OK")
</pallas_src>

<mosaic_0001>
module attributes {stable_mosaic.version = 11 : i64} {
  func.func @_fused_kernel(%arg0: i32, %arg1: memref<1x2x8xf32, #tpu.memory_space<vmem>>, %arg2: memref<1x8x1008xf32, #tpu.memory_space<vmem>>, %arg3: memref<8x1008xf32, #tpu.memory_space<vmem>>, %arg4: memref<1x4x1008xf32, #tpu.memory_space<vmem>>, %arg5: memref<1x8x1008xf32, #tpu.memory_space<vmem>>, %arg6: memref<1x8x128xf32, #tpu.memory_space<vmem>>) attributes {dimension_semantics = [#tpu.dimension_semantics<parallel>], iteration_bounds = array<i64: 2>, scalar_prefetch = 0 : i64, scratch_operands = 0 : i64, tpu.core_type = #tpu.core_type<tc>, window_params = [{transform_indices = @transform_0, window_bounds = array<i64: 1, 2, 8>}, {transform_indices = @transform_1, window_bounds = array<i64: 1, 8, 1008>}, {pipeline_mode = #tpu.pipeline_mode<synchronous>, transform_indices = @transform_2, window_bounds = array<i64: 8, 1008>}, {transform_indices = @transform_3, window_bounds = array<i64: 1, 4, 1008>}, {transform_indices = @transform_4, window_bounds = array<i64: 1, 8, 1008>}, {transform_indices = @transform_5, window_bounds = array<i64: 1, 8, 128>}]} {
    %c0 = arith.constant 0 : index
    %c0_0 = arith.constant 0 : index
    %c0_1 = arith.constant 0 : index
    %0 = vector.load %arg2[%c0, %c0_0, %c0_1] : memref<1x8x1008xf32, #tpu.memory_space<vmem>>, vector<1x8x1008xf32>
    %1 = vector.shape_cast %0 : vector<1x8x1008xf32> to vector<8x1008xf32>
    %c0_2 = arith.constant 0 : index
    %c0_3 = arith.constant 0 : index
    %2 = vector.load %arg3[%c0_2, %c0_3] : memref<8x1008xf32, #tpu.memory_space<vmem>>, vector<8x1008xf32>
    %c0_4 = arith.constant 0 : index
    %c0_5 = arith.constant 0 : index
    %c0_6 = arith.constant 0 : index
    %3 = vector.load %arg4[%c0_4, %c0_5, %c0_6] : memref<1x4x1008xf32, #tpu.memory_space<vmem>>, vector<1x4x1008xf32>
    %4 = vector.shape_cast %3 : vector<1x4x1008xf32> to vector<4x1008xf32>
    %c0_7 = arith.constant 0 : index
    %c0_8 = arith.constant 0 : index
    %c0_9 = arith.constant 0 : index
    %5 = vector.load %arg1[%c0_7, %c0_8, %c0_9] : memref<1x2x8xf32, #tpu.memory_space<vmem>>, vector<1x2x8xf32>
    %6 = vector.shape_cast %5 : vector<1x2x8xf32> to vector<2x8xf32>
    %7 = vector.extract_strided_slice %2 {offsets = [4, 0], sizes = [1, 1008], strides = [1, 1]} : vector<8x1008xf32> to vector<1x1008xf32>
    %8 = vector.extract_strided_slice %1 {offsets = [0, 0], sizes = [2, 1008], strides = [1, 1]} : vector<8x1008xf32> to vector<2x1008xf32>
    %cst = arith.constant 0.000000e+00 : f32
    %9 = vector.broadcast %cst : f32 to vector<2x1008xf32>
    %10 = arith.subf %9, %8 : vector<2x1008xf32>
    %11 = math.exp %10 : vector<2x1008xf32>
    %cst_10 = arith.constant 1.000000e+00 : f32
    %12 = vector.broadcast %cst_10 : f32 to vector<2x1008xf32>
    %13 = arith.addf %12, %11 : vector<2x1008xf32>
    %cst_11 = arith.constant 1.000000e+00 : f32
    %14 = vector.broadcast %cst_11 : f32 to vector<2x1008xf32>
    %15 = arith.divf %14, %13 : vector<2x1008xf32>
    %16 = vector.extract_strided_slice %2 {offsets = [0, 0], sizes = [2, 1008], strides = [1, 1]} : vector<8x1008xf32> to vector<2x1008xf32>
    %17 = arith.addf %15, %16 : vector<2x1008xf32>
    %18 = vector.broadcast %7 : vector<1x1008xf32> to vector<2x1008xf32>
    %19 = arith.mulf %17, %18 : vector<2x1008xf32>
    %20 = vector.extract_strided_slice %1 {offsets = [2, 0], sizes = [2, 1008], strides = [1, 1]} : vector<8x1008xf32> to vector<2x1008xf32>
    %21 = math.exp %20 : vector<2x1008xf32>
    %22 = vector.extract_strided_slice %2 {offsets = [2, 0], sizes = [2, 1008], strides = [1, 1]} : vector<8x1008xf32> to vector<2x1008xf32>
    %23 = arith.mulf %21, %22 : vector<2x1008xf32>
    %24 = vector.broadcast %7 : vector<1x1008xf32> to vector<2x1008xf32>
    %25 = arith.mulf %23, %24 : vector<2x1008xf32>
    %26 = vector.extract_strided_slice %1 {offsets = [4, 0], sizes = [4, 1008], strides = [1, 1]} : vector<8x1008xf32> to vector<4x1008xf32>
    %cst_12 = arith.constant 0.000000e+00 : f32
    %27 = vector.broadcast %cst_12 : f32 to vector<4x1008xf32>
    %28 = arith.subf %27, %26 : vector<4x1008xf32>
    %29 = math.exp %28 : vector<4x1008xf32>
    %cst_13 = arith.constant 1.000000e+00 : f32
    %30 = vector.broadcast %cst_13 : f32 to vector<4x1008xf32>
    %31 = arith.addf %30, %29 : vector<4x1008xf32>
    %cst_14 = arith.constant 1.000000e+00 : f32
    %32 = vector.broadcast %cst_14 : f32 to vector<4x1008xf32>
    %33 = arith.divf %32, %31 : vector<4x1008xf32>
    %c0_15 = arith.constant 0 : index
    %c0_16 = arith.constant 0 : index
    %c0_17 = arith.constant 0 : index
    %34 = vector.load %arg5[%c0_15, %c0_16, %c0_17] : memref<1x8x1008xf32, #tpu.memory_space<vmem>>, vector<1x2x1008xf32>
    %35 = vector.shape_cast %34 : vector<1x2x1008xf32> to vector<2x1008xf32>
    %36 = vector.shape_cast %19 : vector<2x1008xf32> to vector<1x2x1008xf32>
    tpu.vector_store %arg5[%c0_15, %c0_16, %c0_17], %36 {strides = array<i32>} : memref<1x8x1008xf32, #tpu.memory_space<vmem>>, vector<1x2x1008xf32>,
    %c0_18 = arith.constant 0 : index
    %c2 = arith.constant 2 : index
    %c0_19 = arith.constant 0 : index
    %37 = vector.load %arg5[%c0_18, %c2, %c0_19] : memref<1x8x1008xf32, #tpu.memory_space<vmem>>, vector<1x2x1008xf32>
    %38 = vector.shape_cast %37 : vector<1x2x1008xf32> to vector<2x1008xf32>
    %39 = vector.shape_cast %25 : vector<2x1008xf32> to vector<1x2x1008xf32>
    tpu.vector_store %arg5[%c0_18, %c2, %c0_19], %39 {strides = array<i32>} : memref<1x8x1008xf32, #tpu.memory_space<vmem>>, vector<1x2x1008xf32>,
    %c0_20 = arith.constant 0 : index
    %c4 = arith.constant 4 : index
    %c0_21 = arith.constant 0 : index
    %40 = vector.load %arg5[%c0_20, %c4, %c0_21] : memref<1x8x1008xf32, #tpu.memory_space<vmem>>, vector<1x4x1008xf32>
    %41 = vector.shape_cast %40 : vector<1x4x1008xf32> to vector<4x1008xf32>
    %42 = vector.shape_cast %33 : vector<4x1008xf32> to vector<1x4x1008xf32>
    tpu.vector_store %arg5[%c0_20, %c4, %c0_21], %42 {strides = array<i32>} : memref<1x8x1008xf32, #tpu.memory_space<vmem>>, vector<1x4x1008xf32>,
    %43 = vector.extract_strided_slice %19 {offsets = [0, 0], sizes = [1, 1008], strides = [1, 1]} : vector<2x1008xf32> to vector<1x1008xf32>
    %44 = vector.extract_strided_slice %19 {offsets = [1, 0], sizes = [1, 1008], strides = [1, 1]} : vector<2x1008xf32> to vector<1x1008xf32>
    %45 = vector.extract_strided_slice %25 {offsets = [0, 0], sizes = [1, 1008], strides = [1, 1]} : vector<2x1008xf32> to vector<1x1008xf32>
    %46 = vector.extract_strided_slice %25 {offsets = [1, 0], sizes = [1, 1008], strides = [1, 1]} : vector<2x1008xf32> to vector<1x1008xf32>
    %47 = vector.extract_strided_slice %33 {offsets = [0, 0], sizes = [1, 1008], strides = [1, 1]} : vector<4x1008xf32> to vector<1x1008xf32>
    %48 = arith.addf %43, %45 : vector<1x1008xf32>
    %49 = arith.addf %44, %46 : vector<1x1008xf32>
    %50 = arith.mulf %45, %46 : vector<1x1008xf32>
    %cst_22 = arith.constant 1.000000e+00 : f32
    %51 = vector.broadcast %cst_22 : f32 to vector<1x1008xf32>
    %52 = arith.subf %51, %47 : vector<1x1008xf32>
    %cst_23 = arith.constant 9.99999971E-10 : f32
    %53 = vector.broadcast %cst_23 : f32 to vector<1x1008xf32>
    %54 = arith.addf %52, %53 : vector<1x1008xf32>
    %55 = math.log %54 : vector<1x1008xf32>
    %56 = vector.extract_strided_slice %6 {offsets = [0, 0], sizes = [2, 1], strides = [1, 1]} : vector<2x8xf32> to vector<2x1xf32>
    %57 = vector.extract_strided_slice %6 {offsets = [0, 1], sizes = [2, 1], strides = [1, 1]} : vector<2x8xf32> to vector<2x1xf32>
    %58 = vector.extract_strided_slice %6 {offsets = [0, 2], sizes = [2, 1], strides = [1, 1]} : vector<2x8xf32> to vector<2x1xf32>
    %59 = vector.extract_strided_slice %6 {offsets = [0, 3], sizes = [2, 1], strides = [1, 1]} : vector<2x8xf32> to vector<2x1xf32>
    %60 = vector.extract_strided_slice %6 {offsets = [0, 4], sizes = [2, 1], strides = [1, 1]} : vector<2x8xf32> to vector<2x1xf32>
    %61 = vector.broadcast %43 : vector<1x1008xf32> to vector<2x1008xf32>
    %62 = vector.broadcast %56 : vector<2x1xf32> to vector<2x1008xf32>
    %63 = arith.maximumf %61, %62 : vector<2x1008xf32>
    %64 = vector.broadcast %44 : vector<1x1008xf32> to vector<2x1008xf32>
    %65 = vector.broadcast %57 : vector<2x1xf32> to vector<2x1008xf32>
    %66 = arith.maximumf %64, %65 : vector<2x1008xf32>
    %67 = arith.addf %56, %58 : vector<2x1xf32>
    %68 = vector.broadcast %48 : vector<1x1008xf32> to vector<2x1008xf32>
    %69 = vector.broadcast %67 : vector<2x1xf32> to vector<2x1008xf32>
    %70 = arith.minimumf %68, %69 : vector<2x1008xf32>
    %71 = arith.addf %57, %59 : vector<2x1xf32>
    %72 = vector.broadcast %49 : vector<1x1008xf32> to vector<2x1008xf32>
    %73 = vector.broadcast %71 : vector<2x1xf32> to vector<2x1008xf32>
    %74 = arith.minimumf %72, %73 : vector<2x1008xf32>
    %75 = arith.subf %70, %63 : vector<2x1008xf32>
    %cst_24 = arith.constant 0.000000e+00 : f32
    %76 = vector.broadcast %cst_24 : f32 to vector<2x1008xf32>
    %77 = arith.maximumf %75, %76 : vector<2x1008xf32>
    %78 = arith.subf %74, %66 : vector<2x1008xf32>
    %cst_25 = arith.constant 0.000000e+00 : f32
    %79 = vector.broadcast %cst_25 : f32 to vector<2x1008xf32>
    %80 = arith.maximumf %78, %79 : vector<2x1008xf32>
    %81 = arith.mulf %77, %80 : vector<2x1008xf32>
    %82 = arith.mulf %58, %59 : vector<2x1xf32>
    %83 = vector.broadcast %50 : vector<1x1008xf32> to vector<2x1008xf32>
    %84 = vector.broadcast %82 : vector<2x1xf32> to vector<2x1008xf32>
    %85 = arith.addf %83, %84 : vector<2x1008xf32>
    %86 = arith.subf %85, %81 : vector<2x1008xf32>
    %87 = tpu.reciprocal %86 {approx = true} : vector<2x1008xf32> -> vector<2x1008xf32>
    %88 = arith.mulf %86, %87 : vector<2x1008xf32>
    %cst_26 = arith.constant 2.000000e+00 : f32
    %89 = vector.broadcast %cst_26 : f32 to vector<2x1008xf32>
    %90 = arith.subf %89, %88 : vector<2x1008xf32>
    %91 = arith.mulf %87, %90 : vector<2x1008xf32>
    %92 = arith.mulf %81, %91 : vector<2x1008xf32>
    %93 = tpu.iota {dimensions = array<i32: 1>} : vector<1x1008xi32>
    %cst_27 = arith.constant dense<0xFF800000> : vector<2xf32>
    %94 = vector.multi_reduction <maximumf>, %92, %cst_27 [1] : vector<2x1008xf32> to vector<2xf32>
    %95 = vector.shape_cast %94 : vector<2xf32> to vector<2x1xf32>
    %96 = vector.broadcast %95 : vector<2x1xf32> to vector<2x1008xf32>
    %97 = arith.cmpf oeq, %92, %96 : vector<2x1008xf32>
    %c1008_i32 = arith.constant 1008 : i32
    %98 = vector.shape_cast %93 : vector<1x1008xi32> to vector<1x1008xi32>
    %99 = vector.broadcast %98 : vector<1x1008xi32> to vector<2x1008xi32>
    %100 = vector.broadcast %c1008_i32 : i32 to vector<2x1008xi32>
    %101 = arith.select %97, %99, %100 : vector<2x1008xi1>, vector<2x1008xi32>
    %cst_28 = arith.constant dense<2147483647> : vector<2xi32>
    %102 = vector.multi_reduction <minsi>, %101, %cst_28 [1] : vector<2x1008xi32> to vector<2xi32>
    %103 = vector.shape_cast %102 : vector<2xi32> to vector<2x1xi32>
    %104 = vector.broadcast %93 : vector<1x1008xi32> to vector<2x1008xi32>
    %105 = vector.broadcast %103 : vector<2x1xi32> to vector<2x1008xi32>
    %106 = arith.cmpi eq, %104, %105 : vector<2x1008xi32>
    %107 = arith.extui %106 : vector<2x1008xi1> to vector<2x1008xi32>
    %108 = arith.sitofp %107 : vector<2x1008xi32> to vector<2x1008xf32>
    %cst_29 = arith.constant 5.000000e-01 : f32
    %109 = vector.broadcast %cst_29 : f32 to vector<2x1008xf32>
    %110 = arith.cmpf olt, %92, %109 : vector<2x1008xf32>
    %111 = arith.extui %110 : vector<2x1008xi1> to vector<2x1008xi32>
    %112 = arith.sitofp %111 : vector<2x1008xi32> to vector<2x1008xf32>
    %113 = vector.broadcast %55 : vector<1x1008xf32> to vector<2x1008xf32>
    %114 = arith.mulf %112, %113 : vector<2x1008xf32>
    %cst_30 = arith.constant dense<0.000000e+00> : vector<2xf32>
    %115 = vector.multi_reduction <add>, %114, %cst_30 [1] : vector<2x1008xf32> to vector<2xf32>
    %116 = vector.shape_cast %115 : vector<2xf32> to vector<2x1xf32>
    %cst_31 = arith.constant dense<0.000000e+00> : vector<2xf32>
    %117 = vector.multi_reduction <add>, %112, %cst_31 [1] : vector<2x1008xf32> to vector<2xf32>
    %118 = vector.shape_cast %117 : vector<2xf32> to vector<2x1xf32>
    %119 = tpu.reciprocal %118 {approx = true} : vector<2x1xf32> -> vector<2x1xf32>
    %120 = arith.mulf %118, %119 : vector<2x1xf32>
    %cst_32 = arith.constant 2.000000e+00 : f32
    %121 = vector.broadcast %cst_32 : f32 to vector<2x1xf32>
    %122 = arith.subf %121, %120 : vector<2x1xf32>
    %123 = arith.mulf %119, %122 : vector<2x1xf32>
    %124 = arith.mulf %116, %123 : vector<2x1xf32>
    %125 = tpu.concatenate %4, %33 in 0 : vector<4x1008xf32>, vector<4x1008xf32> -> vector<8x1008xf32>
    %cst_33 = arith.constant dense<0.000000e+00> : vector<2x8xf32>
    %126 = tpu.matmul %108, %125, %cst_33 {dimension_numbers = #tpu.dot_dimension_numbers<[1], [1], [0], [0], [0, 0, 1, 0], [], []>} : vector<2x1008xf32>, vector<8x1008xf32>, vector<2x8xf32> -> vector<2x8xf32>
    %127 = tpu.iota {dimensions = array<i32: 1>} : vector<2x8xi32>
    %c0_i32 = arith.constant 0 : i32
    %128 = vector.broadcast %c0_i32 : i32 to vector<2x8xi32>
    %129 = arith.cmpi eq, %127, %128 : vector<2x8xi32>
    %c1_i32 = arith.constant 1 : i32
    %130 = vector.broadcast %c1_i32 : i32 to vector<2x8xi32>
    %131 = arith.cmpi eq, %127, %130 : vector<2x8xi32>
    %c2_i32 = arith.constant 2 : i32
    %132 = vector.broadcast %c2_i32 : i32 to vector<2x8xi32>
    %133 = arith.cmpi eq, %127, %132 : vector<2x8xi32>
    %c3_i32 = arith.constant 3 : i32
    %134 = vector.broadcast %c3_i32 : i32 to vector<2x8xi32>
    %135 = arith.cmpi eq, %127, %134 : vector<2x8xi32>
    %cst_34 = arith.constant 0.000000e+00 : f32
    %136 = vector.shape_cast %59 : vector<2x1xf32> to vector<2x1xf32>
    %137 = vector.broadcast %136 : vector<2x1xf32> to vector<2x8xf32>
    %138 = vector.broadcast %cst_34 : f32 to vector<2x8xf32>
    %139 = arith.select %135, %137, %138 : vector<2x8xi1>, vector<2x8xf32>
    %140 = vector.shape_cast %58 : vector<2x1xf32> to vector<2x1xf32>
    %141 = vector.broadcast %140 : vector<2x1xf32> to vector<2x8xf32>
    %142 = arith.select %133, %141, %139 : vector<2x8xi1>, vector<2x8xf32>
    %143 = vector.shape_cast %57 : vector<2x1xf32> to vector<2x1xf32>
    %144 = vector.broadcast %143 : vector<2x1xf32> to vector<2x8xf32>
    %145 = arith.select %131, %144, %142 : vector<2x8xi1>, vector<2x8xf32>
    %146 = vector.shape_cast %56 : vector<2x1xf32> to vector<2x1xf32>
    %147 = vector.broadcast %146 : vector<2x1xf32> to vector<2x8xf32>
    %148 = arith.select %129, %147, %145 : vector<2x8xi1>, vector<2x8xf32>
    %c4_i32 = arith.constant 4 : i32
    %149 = vector.broadcast %c4_i32 : i32 to vector<2x8xi32>
    %150 = arith.cmpi slt, %127, %149 : vector<2x8xi32>
    %151 = arith.subf %126, %148 : vector<2x8xf32>
    %152 = arith.mulf %151, %151 : vector<2x8xf32>
    %cst_35 = arith.constant 0.000000e+00 : f32
    %153 = vector.broadcast %cst_35 : f32 to vector<2x8xf32>
    %154 = arith.select %150, %152, %153 : vector<2x8xi1>, vector<2x8xf32>
    %cst_36 = arith.constant dense<0.000000e+00> : vector<2xf32>
    %155 = vector.multi_reduction <add>, %154, %cst_36 [1] : vector<2x8xf32> to vector<2xf32>
    %156 = vector.shape_cast %155 : vector<2xf32> to vector<2x1xf32>
    %cst_37 = arith.constant 2.500000e-01 : f32
    %157 = vector.broadcast %cst_37 : f32 to vector<2x1xf32>
    %158 = arith.mulf %156, %157 : vector<2x1xf32>
    %c4_i32_38 = arith.constant 4 : i32
    %159 = vector.broadcast %c4_i32_38 : i32 to vector<2x8xi32>
    %160 = arith.cmpi eq, %127, %159 : vector<2x8xi32>
    %cst_39 = arith.constant 0.000000e+00 : f32
    %161 = vector.broadcast %cst_39 : f32 to vector<2x8xf32>
    %162 = arith.select %160, %126, %161 : vector<2x8xi1>, vector<2x8xf32>
    %cst_40 = arith.constant dense<0.000000e+00> : vector<2xf32>
    %163 = vector.multi_reduction <add>, %162, %cst_40 [1] : vector<2x8xf32> to vector<2xf32>
    %164 = vector.shape_cast %163 : vector<2xf32> to vector<2x1xf32>
    %cst_41 = arith.constant 9.99999971E-10 : f32
    %165 = vector.broadcast %cst_41 : f32 to vector<2x1xf32>
    %166 = arith.addf %164, %165 : vector<2x1xf32>
    %167 = math.log %166 : vector<2x1xf32>
    %c5_i32 = arith.constant 5 : i32
    %168 = vector.broadcast %c5_i32 : i32 to vector<2x8xi32>
    %169 = arith.cmpi sge, %127, %168 : vector<2x8xi32>
    %cst_42 = arith.constant 0xFF800000 : f32
    %170 = vector.broadcast %cst_42 : f32 to vector<2x8xf32>
    %171 = arith.select %169, %126, %170 : vector<2x8xi1>, vector<2x8xf32>
    %cst_43 = arith.constant dense<0xFF800000> : vector<2xf32>
    %172 = vector.multi_reduction <maximumf>, %171, %cst_43 [1] : vector<2x8xf32> to vector<2xf32>
    %173 = vector.shape_cast %172 : vector<2xf32> to vector<2x1xf32>
    %174 = vector.broadcast %173 : vector<2x1xf32> to vector<2x8xf32>
    %175 = arith.subf %126, %174 : vector<2x8xf32>
    %cst_44 = arith.constant 0xFF800000 : f32
    %176 = vector.broadcast %cst_44 : f32 to vector<2x8xf32>
    %177 = arith.select %169, %175, %176 : vector<2x8xi1>, vector<2x8xf32>
    %178 = math.exp %177 : vector<2x8xf32>
    %cst_45 = arith.constant dense<0.000000e+00> : vector<2xf32>
    %179 = vector.multi_reduction <add>, %178, %cst_45 [1] : vector<2x8xf32> to vector<2xf32>
    %180 = vector.shape_cast %179 : vector<2xf32> to vector<2x1xf32>
    %181 = math.log %180 : vector<2x1xf32>
    %182 = arith.addf %173, %181 : vector<2x1xf32>
    %183 = arith.fptosi %60 : vector<2x1xf32> to vector<2x1xi32>
    %c5_i32_46 = arith.constant 5 : i32
    %184 = vector.broadcast %c5_i32_46 : i32 to vector<2x1xi32>
    %185 = arith.addi %184, %183 : vector<2x1xi32>
    %186 = vector.broadcast %185 : vector<2x1xi32> to vector<2x8xi32>
    %187 = arith.cmpi eq, %127, %186 : vector<2x8xi32>
    %cst_47 = arith.constant 0.000000e+00 : f32
    %188 = vector.broadcast %cst_47 : f32 to vector<2x8xf32>
    %189 = arith.select %187, %126, %188 : vector<2x8xi1>, vector<2x8xf32>
    %cst_48 = arith.constant dense<0.000000e+00> : vector<2xf32>
    %190 = vector.multi_reduction <add>, %189, %cst_48 [1] : vector<2x8xf32> to vector<2xf32>
    %191 = vector.shape_cast %190 : vector<2xf32> to vector<2x1xf32>
    %192 = arith.subf %182, %191 : vector<2x1xf32>
    %cst_49 = arith.constant 1.000000e+00 : f32
    %193 = vector.broadcast %cst_49 : f32 to vector<2x1xf32>
    %194 = arith.mulf %193, %158 : vector<2x1xf32>
    %cst_50 = arith.constant 1.000000e+00 : f32
    %195 = vector.broadcast %cst_50 : f32 to vector<2x1xf32>
    %196 = arith.mulf %195, %167 : vector<2x1xf32>
    %197 = arith.subf %194, %196 : vector<2x1xf32>
    %cst_51 = arith.constant 1.000000e+00 : f32
    %198 = vector.broadcast %cst_51 : f32 to vector<2x1xf32>
    %199 = arith.mulf %198, %124 : vector<2x1xf32>
    %200 = arith.subf %197, %199 : vector<2x1xf32>
    %cst_52 = arith.constant 1.000000e+00 : f32
    %201 = vector.broadcast %cst_52 : f32 to vector<2x1xf32>
    %202 = arith.mulf %201, %192 : vector<2x1xf32>
    %203 = arith.subf %200, %202 : vector<2x1xf32>
    %204 = vector.shape_cast %203 : vector<2x1xf32> to vector<1x2x1xf32>
    %cst_53 = arith.constant dense<0.000000e+00> : vector<1xf32>
    %205 = vector.multi_reduction <add>, %204, %cst_53 [1, 2] : vector<1x2x1xf32> to vector<1xf32>
    %206 = vector.shape_cast %205 : vector<1xf32> to vector<1x1x1xf32>
    %207 = vector.extract %206[0, 0, 0] : f32 from vector<1x1x1xf32>
    %208 = vector.broadcast %207 : f32 to vector<1x8x128xf32>
    %c0_54 = arith.constant 0 : index
    %c0_55 = arith.constant 0 : index
    %c0_56 = arith.constant 0 : index
    %209 = vector.load %arg6[%c0_54, %c0_55, %c0_56] : memref<1x8x128xf32, #tpu.memory_space<vmem>>, vector<1x8x128xf32>
    tpu.vector_store %arg6[%c0_54, %c0_55, %c0_56], %208 {strides = array<i32>} : memref<1x8x128xf32, #tpu.memory_space<vmem>>, vector<1x8x128xf32>,
    return
  }
  func.func @transform_0(%arg0: i32) -> (i32, i32, i32) {
    %c0_i32 = arith.constant 0 : i32
    %c0_i32_0 = arith.constant 0 : i32
    %c0_i32_1 = arith.constant 0 : i32
    return %arg0, %c0_i32, %c0_i32_0 : i32, i32, i32
  }
  func.func @transform_1(%arg0: i32) -> (i32, i32, i32) {
    %c0_i32 = arith.constant 0 : i32
    %c0_i32_0 = arith.constant 0 : i32
    %c0_i32_1 = arith.constant 0 : i32
    return %arg0, %c0_i32, %c0_i32_0 : i32, i32, i32
  }
  func.func @transform_2(%arg0: i32) -> (i32, i32) {
    %c0_i32 = arith.constant 0 : i32
    %c0_i32_0 = arith.constant 0 : i32
    %c0_i32_1 = arith.constant 0 : i32
    return %c0_i32, %c0_i32_0 : i32, i32
  }
  func.func @transform_3(%arg0: i32) -> (i32, i32, i32) {
    %c0_i32 = arith.constant 0 : i32
    %c0_i32_0 = arith.constant 0 : i32
    %c0_i32_1 = arith.constant 0 : i32
    return %arg0, %c0_i32, %c0_i32_0 : i32, i32, i32
  }
  func.func @transform_4(%arg0: i32) -> (i32, i32, i32) {
    %c0_i32 = arith.constant 0 : i32
    %c0_i32_0 = arith.constant 0 : i32
    %c0_i32_1 = arith.constant 0 : i32
    return %arg0, %c0_i32, %c0_i32_0 : i32, i32, i32
  }
  func.func @transform_5(%arg0: i32) -> (i32, i32, i32) {
    %c0_i32 = arith.constant 0 : i32
    %c0_i32_0 = arith.constant 0 : i32
    %c0_i32_1 = arith.constant 0 : i32
    return %arg0, %c0_i32, %c0_i32_0 : i32, i32, i32
  }
}

</mosaic_0001>

<llo_original>
// kernel: yolo_loss.1
$region0: #{yolo_loss.1}
  #allocation0 [shape = 'u32[]', space=smem, size = 0x4, offset = 0x4, fixed_abs, tag = 'smem constant byte address 0x4 - core index']
  #allocation1 [shape = 'u32[72,128]{1,0:T(1,128)}', space=vmem, size = 0x9000, scoped, tag = 'internal scratch']
  %s0 = inlined_call_operand.vmem [shape: f32[2,2,8], index: 0, kind: input, shape index: {}]
  %s1 = inlined_call_operand.vmem [shape: f32[2,8,1008], index: 1, kind: input, shape index: {}]
  %s2 = inlined_call_operand.vmem [shape: f32[8,1008], index: 2, kind: input, shape index: {}]
  %s3 = inlined_call_operand.vmem [shape: f32[2,4,1008], index: 3, kind: input, shape index: {}]
  %s4 = inlined_call_operand.hbm [shape: f32[2,8,1008], index: 4, kind: output, shape index: {0}]
  %s5 = inlined_call_operand.vmem [shape: f32[2,8,128], index: 5, kind: output, shape index: {1}]
  %6 = xla_tuple %s4, %s5
  %s7 = sld [smem:[#allocation0]]
  $region57: #{yolo_loss.1} parent=0
    _
  %s9 = ssub.s32 1, %s7
  %s10 = scalar_select 0, %s9, %s7
  $region1: #{yolo_loss.1} parent=0
    #allocation2 [shape = 'u8[65536]{0}', space=vmem, size = 0x10000, scoped, tag = 'output window, operand 0']
    #allocation3 [shape = 's32[2]{0}', space=sflag, size = 0x8, scoped, tag = 'scoped memory for yolo_loss.1']
    %11 = vsyncpa [#allocation3], 0
    %s12 = scalar_lea.sflag [#allocation3], 1
    %13 = vsyncpa %s12, 0
    loop: start=0, step=1, limit=4
    $region2: #{yolo_loss.1} parent=1 // loop_pre_header
      _
    $region3: #{yolo_loss.1} parent=1 // loop_header
      %s15 = sphi 0, %s19
      %p16 = scmp.ge.s32.totalorder %s15, 4
      %s25 = sphi 0, %s27
      %s28 = sphi 0, %s25
      %s29 = sphi 0, %s28
      %s45 = sphi 0, %s29
      %s51 = sphi 0, %s53
      %s54 = sphi 0, %s51
      %s55 = sphi 0, %s54
      %s71 = sphi 0, %s55
      %s75 = sphi 0, %s75
      %s77 = sphi 0, %s75
      %s78 = sphi 0, %s77
      %s92 = sphi 0, %s78
      %s98 = sphi 0, %s100
      %s101 = sphi 0, %s98
      %s102 = sphi 0, %s101
      %s118 = sphi 0, %s102
      %s124 = sphi 0, %s126
      %s127 = sphi 0, %s124
      %s128 = sphi 0, %s127
      %s144 = sphi 0, %s128
      %s150 = sphi 0, %s152
      %s153 = sphi 0, %s150
      %s154 = sphi 0, %s153
      %s170 = sphi 0, %s154
    $region4: #{yolo_loss.1} parent=1 // loop_header_branch
      %18 = sbr.rel (%p16) target = $region8
    $region5: #{yolo_loss.1} parent=1 // loop_body
      %s20 = ssub.s32 %s15, 1
      %s21 = ssub.s32 %s15, 2
      %s22 = sadd.s32 %s15, 1
      %s23 = ssub.s32 %s15, %s22
      %p24 = scmp.eq.s32.totalorder %s23, 0
      %s26 = sadd.s32 %s25, 1
      %s27 = scalar_select %p24, %s25, %s26
      %p30 = pneg %p24
      %p31 = scmp.eq.s32.totalorder %s15, 1
      %p32 = por %p30, %p31
      %p33 = scmp.ne.s32.totalorder %s25, %s28
      %p34 = scmp.eq.s32.totalorder %s15, 0
      %p35 = por %p33, %p34
      %p36 = scmp.ne.s32.totalorder %s25, %s28
      %p37 = scmp.eq.s32.totalorder %s20, 1
      %p38 = por %p36, %p37
      %p39 = scmp.ne.s32.totalorder %s28, %s29
      %p40 = scmp.eq.s32.totalorder %s20, 0
      %p41 = por %p39, %p40
      %p42 = scmp.ne.s32.totalorder %s28, %s29
      %p43 = scmp.eq.s32.totalorder %s21, 1
      %p44 = por %p42, %p43
      %p46 = scmp.ne.s32.totalorder %s29, %s45
      %p47 = scmp.eq.s32.totalorder %s21, 0
      %p48 = por %p46, %p47
      %s49 = ssub.s32 %s15, %s22
      %p50 = scmp.eq.s32.totalorder %s49, 0
      %s52 = sadd.s32 %s51, 1
      %s53 = scalar_select %p50, %s51, %s52
      %p56 = pneg %p50
      %p57 = scmp.eq.s32.totalorder %s15, 1
      %p58 = por %p56, %p57
      %p59 = scmp.ne.s32.totalorder %s51, %s54
      %p60 = scmp.eq.s32.totalorder %s15, 0
      %p61 = por %p59, %p60
      %p62 = scmp.ne.s32.totalorder %s51, %s54
      %p63 = scmp.eq.s32.totalorder %s20, 1
      %p64 = por %p62, %p63
      %p65 = scmp.ne.s32.totalorder %s54, %s55
      %p66 = scmp.eq.s32.totalorder %s20, 0
      %p67 = por %p65, %p66
      %p68 = scmp.ne.s32.totalorder %s54, %s55
      %p69 = scmp.eq.s32.totalorder %s21, 1
      %p70 = por %p68, %p69
      %p72 = scmp.ne.s32.totalorder %s55, %s71
      %p73 = scmp.eq.s32.totalorder %s21, 0
      %p74 = por %p72, %p73
      %s76 = sadd.s32 %s75, 1
      %p79 = scmp.eq.s32.totalorder %s15, 1
      %p80 = scmp.ne.s32.totalorder %s75, %s77
      %p81 = scmp.eq.s32.totalorder %s15, 0
      %p82 = por %p80, %p81
      %p83 = scmp.ne.s32.totalorder %s75, %s77
      %p84 = scmp.eq.s32.totalorder %s20, 1
      %p85 = por %p83, %p84
      %p86 = scmp.ne.s32.totalorder %s77, %s78
      %p87 = scmp.eq.s32.totalorder %s20, 0
      %p88 = por %p86, %p87
      %p89 = scmp.ne.s32.totalorder %s77, %s78
      %p90 = scmp.eq.s32.totalorder %s21, 1
      %p91 = por %p89, %p90
      %p93 = scmp.ne.s32.totalorder %s78, %s92
      %p94 = scmp.eq.s32.totalorder %s21, 0
      %p95 = por %p93, %p94
      %s96 = ssub.s32 %s15, %s22
      %p97 = scmp.eq.s32.totalorder %s96, 0
      %s99 = sadd.s32 %s98, 1
      %s100 = scalar_select %p97, %s98, %s99
      %p103 = pneg %p97
      %p104 = scmp.eq.s32.totalorder %s15, 1
      %p105 = por %p103, %p104
      %p106 = scmp.ne.s32.totalorder %s98, %s101
      %p107 = scmp.eq.s32.totalorder %s15, 0
      %p108 = por %p106, %p107
      %p109 = scmp.ne.s32.totalorder %s98, %s101
      %p110 = scmp.eq.s32.totalorder %s20, 1
      %p111 = por %p109, %p110
      %p112 = scmp.ne.s32.totalorder %s101, %s102
      %p113 = scmp.eq.s32.totalorder %s20, 0
      %p114 = por %p112, %p113
      %p115 = scmp.ne.s32.totalorder %s101, %s102
      %p116 = scmp.eq.s32.totalorder %s21, 1
      %p117 = por %p115, %p116
      %p119 = scmp.ne.s32.totalorder %s102, %s118
      %p120 = scmp.eq.s32.totalorder %s21, 0
      %p121 = por %p119, %p120
      %s122 = ssub.s32 %s15, %s22
      %p123 = scmp.eq.s32.totalorder %s122, 0
      %s125 = sadd.s32 %s124, 1
      %s126 = scalar_select %p123, %s124, %s125
      %p129 = pneg %p123
      %p130 = scmp.eq.s32.totalorder %s15, 1
      %p131 = por %p129, %p130
      %p132 = scmp.ne.s32.totalorder %s124, %s127
      %p133 = scmp.eq.s32.totalorder %s15, 0
      %p134 = por %p132, %p133
      %p135 = scmp.ne.s32.totalorder %s124, %s127
      %p136 = scmp.eq.s32.totalorder %s20, 1
      %p137 = por %p135, %p136
      %p138 = scmp.ne.s32.totalorder %s127, %s128
      %p139 = scmp.eq.s32.totalorder %s20, 0
      %p140 = por %p138, %p139
      %p141 = scmp.ne.s32.totalorder %s127, %s128
      %p142 = scmp.eq.s32.totalorder %s21, 1
      %p143 = por %p141, %p142
      %p145 = scmp.ne.s32.totalorder %s128, %s144
      %p146 = scmp.eq.s32.totalorder %s21, 0
      %p147 = por %p145, %p146
      %s148 = ssub.s32 %s15, %s22
      %p149 = scmp.eq.s32.totalorder %s148, 0
      %s151 = sadd.s32 %s150, 1
      %s152 = scalar_select %p149, %s150, %s151
      %p155 = pneg %p149
      %p156 = scmp.eq.s32.totalorder %s15, 1
      %p157 = por %p155, %p156
      %p158 = scmp.ne.s32.totalorder %s150, %s153
      %p159 = scmp.eq.s32.totalorder %s15, 0
      %p160 = por %p158, %p159
      %p161 = scmp.ne.s32.totalorder %s150, %s153
      %p162 = scmp.eq.s32.totalorder %s20, 1
      %p163 = por %p161, %p162
      %p164 = scmp.ne.s32.totalorder %s153, %s154
      %p165 = scmp.eq.s32.totalorder %s20, 0
      %p166 = por %p164, %p165
      %p167 = scmp.ne.s32.totalorder %s153, %s154
      %p168 = scmp.eq.s32.totalorder %s21, 1
      %p169 = por %p167, %p168
      %p171 = scmp.ne.s32.totalorder %s154, %s170
      %p172 = scmp.eq.s32.totalorder %s21, 0
      %p173 = por %p171, %p172
      %p174 = scmp.le.s32.totalorder 1, %s15
      %p175 = scmp.lt.s32.totalorder %s15, 3
      %p176 = pnand %p174, %p175
      %p177 = pneg %p176
      // Predicated region
      $region9: #{yolo_loss.1} parent=5 // pred_check
        _
      $region10: #{yolo_loss.1} parent=5 // pred_check_branch
        %179 = sbr.rel (%p176) target = $region12
      $region11: #{yolo_loss.1} parent=5 // pred_region
        %s180 = ssub.s32 %s15, 1
        // Predicated region
        $region13: #{yolo_loss.1} parent=11 // pred_check
          %p181 = pneg %p88
        $region14: #{yolo_loss.1} parent=11 // pred_check_branch
          %183 = sbr.rel (%p181) target = $region16
        $region15: #{yolo_loss.1} parent=11 // pred_region
          _
        $region16: #{yolo_loss.1} parent=11 // pred_fallthru
          _
      $region12: #{yolo_loss.1} parent=5 // pred_fallthru
        _
      %p184 = scmp.lt.s32.totalorder %s15, 2
      // Predicated region
      $region17: #{yolo_loss.1} parent=5 // pred_check
        %p185 = pneg %p184
      $region18: #{yolo_loss.1} parent=5 // pred_check_branch
        %187 = sbr.rel (%p185) target = $region20
      $region19: #{yolo_loss.1} parent=5 // pred_region
        // Predicated region
        $region21: #{yolo_loss.1} parent=19 // pred_check
          %p188 = pneg %p35
        $region22: #{yolo_loss.1} parent=19 // pred_check_branch
          %190 = sbr.rel (%p188) target = $region24
        $region23: #{yolo_loss.1} parent=19 // pred_region
          %p191 = scmp.lt.s32.totalorder %s15, 1
          %s192 = scalar_select %p191, %s15, 1
          %s193 = smul.addr %s192, 2
          %s194 = scalar_lea.vmem %s0, %s193
        $region24: #{yolo_loss.1} parent=19 // pred_fallthru
          _
        // Predicated region
        $region25: #{yolo_loss.1} parent=19 // pred_check
          %p195 = pneg %p61
        $region26: #{yolo_loss.1} parent=19 // pred_check_branch
          %197 = sbr.rel (%p195) target = $region28
        $region27: #{yolo_loss.1} parent=19 // pred_region
          %p198 = scmp.lt.s32.totalorder %s15, 1
          %s199 = scalar_select %p198, %s15, 1
          %s200 = smul.addr %s199, 8
          %s201 = smul.addr %s200, 8
          %s202 = scalar_lea.vmem %s1, %s201
        $region28: #{yolo_loss.1} parent=19 // pred_fallthru
          _
        // Predicated region
        $region29: #{yolo_loss.1} parent=19 // pred_check
          %p203 = pneg %p108
        $region30: #{yolo_loss.1} parent=19 // pred_check_branch
          %205 = sbr.rel (%p203) target = $region32
        $region31: #{yolo_loss.1} parent=19 // pred_region
          %p206 = scmp.lt.s32.totalorder %s15, 1
          %s207 = scalar_select %p206, %s15, 1
          %s208 = smul.addr %s207, 8
          %s209 = smul.addr %s208, 4
          %s210 = scalar_lea.vmem %s3, %s209
        $region32: #{yolo_loss.1} parent=19 // pred_fallthru
          _
      $region20: #{yolo_loss.1} parent=5 // pred_fallthru
        _
      %p211 = scmp.le.s32.totalorder 1, %s15
      %p212 = scmp.lt.s32.totalorder %s15, 3
      %p213 = pnand %p211, %p212
      %p214 = pneg %p213
      // Predicated region
      $region33: #{yolo_loss.1} parent=5 // pred_check
        _
      $region34: #{yolo_loss.1} parent=5 // pred_check_branch
        %216 = sbr.rel (%p213) target = $region36
      $region35: #{yolo_loss.1} parent=5 // pred_region
        %s217 = ssub.s32 %s15, 1
        %p218 = scmp.lt.s32.totalorder %s20, 1
        %s219 = scalar_select %p218, %s20, 1
        %s220 = smul.addr %s219, 2
        %s221 = scalar_lea.vmem %s0, %s220
        %p222 = pneg %p41
        %p223 = pneg %p38
        %p224 = scmp.lt.s32.totalorder %s20, 1
        %s225 = scalar_select %p224, %s20, 1
        %s226 = smul.addr %s225, 8
        %s227 = smul.addr %s226, 8
        %s228 = scalar_lea.vmem %s1, %s227
        %p229 = pneg %p67
        %p230 = pneg %p64
        %p231 = pneg %p88
        %p232 = pneg %p85
        %p233 = scmp.lt.s32.totalorder %s20, 1
        %s234 = scalar_select %p233, %s20, 1
        %s235 = smul.addr %s234, 8
        %s236 = smul.addr %s235, 4
        %s237 = scalar_lea.vmem %s3, %s236
        %p238 = pneg %p114
        %p239 = pneg %p111
        %p240 = pneg %p140
        %p241 = pneg %p137
        %s242 = sand.u32 %s127, 1
        %s243 = scalar_lea.sflag [#allocation3], %s242
        %s244 = sand.u32 %s127, 1
        %s245 = smul.addr %s244, 64
        %s246 = scalar_lea.vmem [#allocation2], %s245
        %p247 = pneg %p166
        %p248 = pneg %p163
        %p249 = scmp.lt.s32.totalorder %s20, 1
        %s250 = scalar_select %p249, %s20, 1
        %s251 = smul.addr %s250, 8
        %s252 = scalar_lea.vmem %s5, %s251
        %p253 = scmp.lt.s32.totalorder %s20, 1
        %s254 = scalar_select %p253, %s20, 1
        %s255 = smul.addr %s254, 2
        %s256 = scalar_lea.vmem %s0, %s255
        %p257 = scmp.lt.s32.totalorder %s20, 1
        %s258 = scalar_select %p257, %s20, 1
        %s259 = smul.addr %s258, 8
        %s260 = smul.addr %s259, 8
        %s261 = scalar_lea.vmem %s1, %s260
        %p262 = scmp.lt.s32.totalorder %s20, 1
        %s263 = scalar_select %p262, %s20, 1
        %s264 = smul.addr %s263, 8
        %s265 = smul.addr %s264, 4
        %s266 = scalar_lea.vmem %s3, %s265
        %p267 = scmp.lt.s32.totalorder %s20, 1
        %s268 = scalar_select %p267, %s20, 1
        %s269 = smul.addr %s268, 8
        %s270 = scalar_lea.vmem %s5, %s269
        %v271 = vld [vmem:[%s261] sm:$0xff]
        %v272 = vld [vmem:[%s261 + $0x8] sm:$0xff]
        %v273 = vld [vmem:[%s261 + $0x10] sm:$0xff]
        %v274 = vld [vmem:[%s261 + $0x18] sm:$0xff]
        %v275 = vld [vmem:[%s261 + $0x20] sm:$0xff]
        %v276 = vld [vmem:[%s261 + $0x28] sm:$0xff]
        %v277 = vld [vmem:[%s261 + $0x30] sm:$0xff]
        %v278 = vld [vmem:[%s261 + $0x38] sm:$0xff]
        %v279 = vld [vmem:[%s2] sm:$0xff]
        %v280 = vld [vmem:[%s2 + $0x8] sm:$0xff]
        %v281 = vld [vmem:[%s2 + $0x10] sm:$0xff]
        %v282 = vld [vmem:[%s2 + $0x18] sm:$0xff]
        %v283 = vld [vmem:[%s2 + $0x20] sm:$0xff]
        %v284 = vld [vmem:[%s2 + $0x28] sm:$0xff]
        %v285 = vld [vmem:[%s2 + $0x30] sm:$0xff]
        %v286 = vld [vmem:[%s2 + $0x38] sm:$0xff]
        %v287 = vld [vmem:[%s266] sm:$0xff]
        %v288 = vld [vmem:[%s266 + $0x8] sm:$0xff]
        %v289 = vld [vmem:[%s266 + $0x10] sm:$0xff]
        %v290 = vld [vmem:[%s266 + $0x18] sm:$0xff]
        %v291 = vld [vmem:[%s256] sm:$0x3]
        %v292 = vsub.f32 0.0, %v271
        %v293 = vsub.f32 0.0, %v272
        %v294 = vsub.f32 0.0, %v273
        %v295 = vsub.f32 0.0, %v274
        %v296 = vsub.f32 0.0, %v275
        %v297 = vsub.f32 0.0, %v276
        %v298 = vsub.f32 0.0, %v277
        %v299 = vsub.f32 0.0, %v278
        %v300 = vmul.f32 %v292, 1.442695
        %v301 = vpow.pop %v300
        %v302 = vmul.f32 %v293, 1.442695
        %v303 = vpow.pop %v302
        %v304 = vmul.f32 %v294, 1.442695
        %v305 = vpow.pop %v304
        %v306 = vmul.f32 %v295, 1.442695
        %v307 = vpow.pop %v306
        %v308 = vmul.f32 %v296, 1.442695
        %v309 = vpow.pop %v308
        %v310 = vmul.f32 %v297, 1.442695
        %v311 = vpow.pop %v310
        %v312 = vmul.f32 %v298, 1.442695
        %v313 = vpow.pop %v312
        %v314 = vmul.f32 %v299, 1.442695
        %v315 = vpow.pop %v314
        %v316 = vadd.f32 %v301, 1.0
        %v317 = vadd.f32 %v303, 1.0
        %v318 = vadd.f32 %v305, 1.0
        %v319 = vadd.f32 %v307, 1.0
        %v320 = vadd.f32 %v309, 1.0
        %v321 = vadd.f32 %v311, 1.0
        %v322 = vadd.f32 %v313, 1.0
        %v323 = vadd.f32 %v315, 1.0
        %v324 = vrcp.pop %v316
        %v325 = vmul.f32 %v316, %v324
        %v326 = vsub.f32 1.0, %v325
        %v327 = vmul.f32 %v324, %v326
        %v328 = vadd.f32 %v324, %v327
        %vm329 = vweird.f32 %v316
        %vm330 = vweird.f32 %v324
        %vm331 = vmor %vm329, %vm330
        %v332 = vsel %vm331, %v324, %v328
        %v333 = vand.u32 2147483647, %v316
        %vm334 = vcmp.eq.f32.partialorder %v333, 8.507059e+37
        %v335 = vand.u32 %v316, 2147483648
        %v336 = vor.u32 1.1754944e-38, %v335
        %v337 = vsel %vm334, %v336, %v332
        %v338 = vmul.f32 1.0, %v337
        %v339 = vrcp.pop %v317
        %v340 = vmul.f32 %v317, %v339
        %v341 = vsub.f32 1.0, %v340
        %v342 = vmul.f32 %v339, %v341
        %v343 = vadd.f32 %v339, %v342
        %vm344 = vweird.f32 %v317
        %vm345 = vweird.f32 %v339
        %vm346 = vmor %vm344, %vm345
        %v347 = vsel %vm346, %v339, %v343
        %v348 = vand.u32 2147483647, %v317
        %vm349 = vcmp.eq.f32.partialorder %v348, 8.507059e+37
        %v350 = vand.u32 %v317, 2147483648
        %v351 = vor.u32 1.1754944e-38, %v350
        %v352 = vsel %vm349, %v351, %v347
        %v353 = vmul.f32 1.0, %v352
        %v354 = vrcp.pop %v318
        %v355 = vmul.f32 %v318, %v354
        %v356 = vsub.f32 1.0, %v355
        %v357 = vmul.f32 %v354, %v356
        %v358 = vadd.f32 %v354, %v357
        %vm359 = vweird.f32 %v318
        %vm360 = vweird.f32 %v354
        %vm361 = vmor %vm359, %vm360
        %v362 = vsel %vm361, %v354, %v358
        %v363 = vand.u32 2147483647, %v318
        %vm364 = vcmp.eq.f32.partialorder %v363, 8.507059e+37
        %v365 = vand.u32 %v318, 2147483648
        %v366 = vor.u32 1.1754944e-38, %v365
        %v367 = vsel %vm364, %v366, %v362
        %v368 = vmul.f32 1.0, %v367
        %v369 = vrcp.pop %v319
        %v370 = vmul.f32 %v319, %v369
        %v371 = vsub.f32 1.0, %v370
        %v372 = vmul.f32 %v369, %v371
        %v373 = vadd.f32 %v369, %v372
        %vm374 = vweird.f32 %v319
        %vm375 = vweird.f32 %v369
        %vm376 = vmor %vm374, %vm375
        %v377 = vsel %vm376, %v369, %v373
        %v378 = vand.u32 2147483647, %v319
        %vm379 = vcmp.eq.f32.partialorder %v378, 8.507059e+37
        %v380 = vand.u32 %v319, 2147483648
        %v381 = vor.u32 1.1754944e-38, %v380
        %v382 = vsel %vm379, %v381, %v377
        %v383 = vmul.f32 1.0, %v382
        %v384 = vrcp.pop %v320
        %v385 = vmul.f32 %v320, %v384
        %v386 = vsub.f32 1.0, %v385
        %v387 = vmul.f32 %v384, %v386
        %v388 = vadd.f32 %v384, %v387
        %vm389 = vweird.f32 %v320
        %vm390 = vweird.f32 %v384
        %vm391 = vmor %vm389, %vm390
        %v392 = vsel %vm391, %v384, %v388
        %v393 = vand.u32 2147483647, %v320
        %vm394 = vcmp.eq.f32.partialorder %v393, 8.507059e+37
        %v395 = vand.u32 %v320, 2147483648
        %v396 = vor.u32 1.1754944e-38, %v395
        %v397 = vsel %vm394, %v396, %v392
        %v398 = vmul.f32 1.0, %v397
        %v399 = vrcp.pop %v321
        %v400 = vmul.f32 %v321, %v399
        %v401 = vsub.f32 1.0, %v400
        %v402 = vmul.f32 %v399, %v401
        %v403 = vadd.f32 %v399, %v402
        %vm404 = vweird.f32 %v321
        %vm405 = vweird.f32 %v399
        %vm406 = vmor %vm404, %vm405
        %v407 = vsel %vm406, %v399, %v403
        %v408 = vand.u32 2147483647, %v321
        %vm409 = vcmp.eq.f32.partialorder %v408, 8.507059e+37
        %v410 = vand.u32 %v321, 2147483648
        %v411 = vor.u32 1.1754944e-38, %v410
        %v412 = vsel %vm409, %v411, %v407
        %v413 = vmul.f32 1.0, %v412
        %v414 = vrcp.pop %v322
        %v415 = vmul.f32 %v322, %v414
        %v416 = vsub.f32 1.0, %v415
        %v417 = vmul.f32 %v414, %v416
        %v418 = vadd.f32 %v414, %v417
        %vm419 = vweird.f32 %v322
        %vm420 = vweird.f32 %v414
        %vm421 = vmor %vm419, %vm420
        %v422 = vsel %vm421, %v414, %v418
        %v423 = vand.u32 2147483647, %v322
        %vm424 = vcmp.eq.f32.partialorder %v423, 8.507059e+37
        %v425 = vand.u32 %v322, 2147483648
        %v426 = vor.u32 1.1754944e-38, %v425
        %v427 = vsel %vm424, %v426, %v422
        %v428 = vmul.f32 1.0, %v427
        %v429 = vrcp.pop %v323
        %v430 = vmul.f32 %v323, %v429
        %v431 = vsub.f32 1.0, %v430
        %v432 = vmul.f32 %v429, %v431
        %v433 = vadd.f32 %v429, %v432
        %vm434 = vweird.f32 %v323
        %vm435 = vweird.f32 %v429
        %vm436 = vmor %vm434, %vm435
        %v437 = vsel %vm436, %v429, %v433
        %v438 = vand.u32 2147483647, %v323
        %vm439 = vcmp.eq.f32.partialorder %v438, 8.507059e+37
        %v440 = vand.u32 %v323, 2147483648
        %v441 = vor.u32 1.1754944e-38, %v440
        %v442 = vsel %vm439, %v441, %v437
        %v443 = vmul.f32 1.0, %v442
        %v444 = vadd.f32 %v338, %v279
        %v445 = vadd.f32 %v353, %v280
        %v446 = vadd.f32 %v368, %v281
        %v447 = vadd.f32 %v383, %v282
        %v448 = vadd.f32 %v398, %v283
        %v449 = vadd.f32 %v413, %v284
        %v450 = vadd.f32 %v428, %v285
        %v451 = vadd.f32 %v443, %v286
        %v452 = vperm.slane %v279, 4
        %v453 = vperm.slane %v280, 4
        %v454 = vperm.slane %v281, 4
        %v455 = vperm.slane %v282, 4
        %v456 = vperm.slane %v283, 4
        %v457 = vperm.slane %v284, 4
        %v458 = vperm.slane %v285, 4
        %v459 = vperm.slane %v286, 4
        %v460 = vmul.f32 %v444, %v452
        %v461 = vmul.f32 %v445, %v453
        %v462 = vmul.f32 %v446, %v454
        %v463 = vmul.f32 %v447, %v455
        %v464 = vmul.f32 %v448, %v456
        %v465 = vmul.f32 %v449, %v457
        %v466 = vmul.f32 %v450, %v458
        %v467 = vmul.f32 %v451, %v459
        %v468 = vmul.f32 %v271, 1.442695
        %v469 = vpow.pop %v468
        %v470 = vmul.f32 %v272, 1.442695
        %v471 = vpow.pop %v470
        %v472 = vmul.f32 %v273, 1.442695
        %v473 = vpow.pop %v472
        %v474 = vmul.f32 %v274, 1.442695
        %v475 = vpow.pop %v474
        %v476 = vmul.f32 %v275, 1.442695
        %v477 = vpow.pop %v476
        %v478 = vmul.f32 %v276, 1.442695
        %v479 = vpow.pop %v478
        %v480 = vmul.f32 %v277, 1.442695
        %v481 = vpow.pop %v480
        %v482 = vmul.f32 %v278, 1.442695
        %v483 = vpow.pop %v482
        %v484 = vmul.f32 %v469, %v279
        %v485 = vmul.f32 %v471, %v280
        %v486 = vmul.f32 %v473, %v281
        %v487 = vmul.f32 %v475, %v282
        %v488 = vmul.f32 %v477, %v283
        %v489 = vmul.f32 %v479, %v284
        %v490 = vmul.f32 %v481, %v285
        %v491 = vmul.f32 %v483, %v286
        %v492 = vmul.f32 %v484, %v452
        %v493 = vmul.f32 %v485, %v453
        %v494 = vmul.f32 %v486, %v454
        %v495 = vmul.f32 %v487, %v455
        %v496 = vmul.f32 %v488, %v456
        %v497 = vmul.f32 %v489, %v457
        %v498 = vmul.f32 %v490, %v458
        %v499 = vmul.f32 %v491, %v459
        %500 = vst [vmem:[%s246] sm:$0x3] %v460
        %501 = vst [vmem:[%s246 + $0x8] sm:$0x3] %v461
        %502 = vst [vmem:[%s246 + $0x10] sm:$0x3] %v462
        %503 = vst [vmem:[%s246 + $0x18] sm:$0x3] %v463
        %504 = vst [vmem:[%s246 + $0x20] sm:$0x3] %v464
        %505 = vst [vmem:[%s246 + $0x28] sm:$0x3] %v465
        %506 = vst [vmem:[%s246 + $0x30] sm:$0x3] %v466
        %vm507 = vcmask 910336
        %508 = vst.msk [vmem:[%s246 + $0x38] sm:$0x3] %vm507, %v467
        %509 = vst [vmem:[%s246] sm:$0xc] %v492
        %510 = vst [vmem:[%s246 + $0x8] sm:$0xc] %v493
        %511 = vst [vmem:[%s246 + $0x10] sm:$0xc] %v494
        %512 = vst [vmem:[%s246 + $0x18] sm:$0xc] %v495
        %513 = vst [vmem:[%s246 + $0x20] sm:$0xc] %v496
        %514 = vst [vmem:[%s246 + $0x28] sm:$0xc] %v497
        %515 = vst [vmem:[%s246 + $0x30] sm:$0xc] %v498
        %vm516 = vcmask 912386
        %517 = vst.msk [vmem:[%s246 + $0x38] sm:$0xc] %vm516, %v499
        %518 = vst [vmem:[%s246] sm:$0xf0] %v338
        %519 = vst [vmem:[%s246 + $0x8] sm:$0xf0] %v353
        %520 = vst [vmem:[%s246 + $0x10] sm:$0xf0] %v368
        %521 = vst [vmem:[%s246 + $0x18] sm:$0xf0] %v383
        %522 = vst [vmem:[%s246 + $0x20] sm:$0xf0] %v398
        %523 = vst [vmem:[%s246 + $0x28] sm:$0xf0] %v413
        %524 = vst [vmem:[%s246 + $0x30] sm:$0xf0] %v428
        %vm525 = vcmask 916484
        %526 = vst.msk [vmem:[%s246 + $0x38] sm:$0xf0] %vm525, %v443
        %v535 = vrot.slane %v492, 2
        %v536 = vrot.slane %v493, 2
        %v537 = vrot.slane %v494, 2
        %v538 = vrot.slane %v495, 2
        %v539 = vrot.slane %v496, 2
        %v540 = vrot.slane %v497, 2
        %v541 = vrot.slane %v498, 2
        %v542 = vrot.slane %v499, 2
        %v551 = vadd.f32 %v460, %v535
        %v552 = vadd.f32 %v461, %v536
        %v553 = vadd.f32 %v462, %v537
        %v554 = vadd.f32 %v463, %v538
        %v555 = vadd.f32 %v464, %v539
        %v556 = vadd.f32 %v465, %v540
        %v557 = vadd.f32 %v466, %v541
        %v558 = vadd.f32 %v467, %v542
        %v559 = vrot.slane %v492, 1
        %v560 = vrot.slane %v493, 1
        %v561 = vrot.slane %v494, 1
        %v562 = vrot.slane %v495, 1
        %v563 = vrot.slane %v496, 1
        %v564 = vrot.slane %v497, 1
        %v565 = vrot.slane %v498, 1
        %v566 = vrot.slane %v499, 1
        %v575 = vmul.f32 %v492, %v559
        %v576 = vmul.f32 %v493, %v560
        %v577 = vmul.f32 %v494, %v561
        %v578 = vmul.f32 %v495, %v562
        %v579 = vmul.f32 %v496, %v563
        %v580 = vmul.f32 %v497, %v564
        %v581 = vmul.f32 %v498, %v565
        %v582 = vmul.f32 %v499, %v566
        %v583 = vsub.f32 1.0, %v338
        %v584 = vsub.f32 1.0, %v353
        %v585 = vsub.f32 1.0, %v368
        %v586 = vsub.f32 1.0, %v383
        %v587 = vsub.f32 1.0, %v398
        %v588 = vsub.f32 1.0, %v413
        %v589 = vsub.f32 1.0, %v428
        %v590 = vsub.f32 1.0, %v443
        %v591 = vadd.f32 %v583, 1e-09
        %v592 = vadd.f32 %v584, 1e-09
        %v593 = vadd.f32 %v585, 1e-09
        %v594 = vadd.f32 %v586, 1e-09
        %v595 = vadd.f32 %v587, 1e-09
        %v596 = vadd.f32 %v588, 1e-09
        %v597 = vadd.f32 %v589, 1e-09
        %v598 = vadd.f32 %v590, 1e-09
        %v599 = vlog2.pop %v591
        %v600 = vmul.f32 %v599, 0.6931472
        %v601 = vlog2.pop %v592
        %v602 = vmul.f32 %v601, 0.6931472
        %v603 = vlog2.pop %v593
        %v604 = vmul.f32 %v603, 0.6931472
        %v605 = vlog2.pop %v594
        %v606 = vmul.f32 %v605, 0.6931472
        %v607 = vlog2.pop %v595
        %v608 = vmul.f32 %v607, 0.6931472
        %v609 = vlog2.pop %v596
        %v610 = vmul.f32 %v609, 0.6931472
        %v611 = vlog2.pop %v597
        %v612 = vmul.f32 %v611, 0.6931472
        %v613 = vlog2.pop %v598
        %v614 = vmul.f32 %v613, 0.6931472
        %v615 = vperm.slane %v460, 0
        %v616 = vperm.slane %v461, 0
        %v617 = vperm.slane %v462, 0
        %v618 = vperm.slane %v463, 0
        %v619 = vperm.slane %v464, 0
        %v620 = vperm.slane %v465, 0
        %v621 = vperm.slane %v466, 0
        %v622 = vperm.slane %v467, 0
        %624 = vset.pattern.permute.xlu0 0
        %625 = vperm.xlu0 %624, %v291
        %v626 = vpop.permute.xlu0 %625
        %v628 = vmax.f32 %v615, %v626
        %v629 = vmax.f32 %v616, %v626
        %v630 = vmax.f32 %v617, %v626
        %v631 = vmax.f32 %v618, %v626
        %v632 = vmax.f32 %v619, %v626
        %v633 = vmax.f32 %v620, %v626
        %v634 = vmax.f32 %v621, %v626
        %v635 = vmax.f32 %v622, %v626
        %v636 = vperm.slane %v460, 1
        %v637 = vperm.slane %v461, 1
        %v638 = vperm.slane %v462, 1
        %v639 = vperm.slane %v463, 1
        %v640 = vperm.slane %v464, 1
        %v641 = vperm.slane %v465, 1
        %v642 = vperm.slane %v466, 1
        %v643 = vperm.slane %v467, 1
        %644 = vset.pattern.permute.xlu0 1
        %645 = vperm.xlu0 %644, %v291
        %v646 = vpop.permute.xlu0 %645
        %v648 = vmax.f32 %v636, %v646
        %v649 = vmax.f32 %v637, %v646
        %v650 = vmax.f32 %v638, %v646
        %v651 = vmax.f32 %v639, %v646
        %v652 = vmax.f32 %v640, %v646
        %v653 = vmax.f32 %v641, %v646
        %v654 = vmax.f32 %v642, %v646
        %v655 = vmax.f32 %v643, %v646
        %656 = vrot.lane.b32.xlu0 %v291, 126
        %v657 = vpop.permute.xlu0 %656
        %v659 = vadd.f32 %v291, %v657
        %v660 = vperm.slane %v551, 0
        %v661 = vperm.slane %v552, 0
        %v662 = vperm.slane %v553, 0
        %v663 = vperm.slane %v554, 0
        %v664 = vperm.slane %v555, 0
        %v665 = vperm.slane %v556, 0
        %v666 = vperm.slane %v557, 0
        %v667 = vperm.slane %v558, 0
        %669 = vset.pattern.permute.xlu0 0
        %670 = vperm.xlu0 %669, %v659
        %v671 = vpop.permute.xlu0 %670
        %v673 = vmin.f32 %v660, %v671
        %v674 = vmin.f32 %v661, %v671
        %v675 = vmin.f32 %v662, %v671
        %v676 = vmin.f32 %v663, %v671
        %v677 = vmin.f32 %v664, %v671
        %v678 = vmin.f32 %v665, %v671
        %v679 = vmin.f32 %v666, %v671
        %v680 = vmin.f32 %v667, %v671
        %v681 = vperm.slane %v551, 1
        %v682 = vperm.slane %v552, 1
        %v683 = vperm.slane %v553, 1
        %v684 = vperm.slane %v554, 1
        %v685 = vperm.slane %v555, 1
        %v686 = vperm.slane %v556, 1
        %v687 = vperm.slane %v557, 1
        %v688 = vperm.slane %v558, 1
        %689 = vset.pattern.permute.xlu0 1
        %690 = vperm.xlu0 %689, %v659
        %v691 = vpop.permute.xlu0 %690
        %v693 = vmin.f32 %v681, %v691
        %v694 = vmin.f32 %v682, %v691
        %v695 = vmin.f32 %v683, %v691
        %v696 = vmin.f32 %v684, %v691
        %v697 = vmin.f32 %v685, %v691
        %v698 = vmin.f32 %v686, %v691
        %v699 = vmin.f32 %v687, %v691
        %v700 = vmin.f32 %v688, %v691
        %v701 = vsub.f32 %v673, %v628
        %v702 = vsub.f32 %v674, %v629
        %v703 = vsub.f32 %v675, %v630
        %v704 = vsub.f32 %v676, %v631
        %v705 = vsub.f32 %v677, %v632
        %v706 = vsub.f32 %v678, %v633
        %v707 = vsub.f32 %v679, %v634
        %v708 = vsub.f32 %v680, %v635
        %v709 = vmax.f32 %v701, 0.0
        %v710 = vmax.f32 %v702, 0.0
        %v711 = vmax.f32 %v703, 0.0
        %v712 = vmax.f32 %v704, 0.0
        %v713 = vmax.f32 %v705, 0.0
        %v714 = vmax.f32 %v706, 0.0
        %v715 = vmax.f32 %v707, 0.0
        %v716 = vmax.f32 %v708, 0.0
        %v717 = vsub.f32 %v693, %v648
        %v718 = vsub.f32 %v694, %v649
        %v719 = vsub.f32 %v695, %v650
        %v720 = vsub.f32 %v696, %v651
        %v721 = vsub.f32 %v697, %v652
        %v722 = vsub.f32 %v698, %v653
        %v723 = vsub.f32 %v699, %v654
        %v724 = vsub.f32 %v700, %v655
        %v725 = vmax.f32 %v717, 0.0
        %v726 = vmax.f32 %v718, 0.0
        %v727 = vmax.f32 %v719, 0.0
        %v728 = vmax.f32 %v720, 0.0
        %v729 = vmax.f32 %v721, 0.0
        %v730 = vmax.f32 %v722, 0.0
        %v731 = vmax.f32 %v723, 0.0
        %v732 = vmax.f32 %v724, 0.0
        %v733 = vmul.f32 %v709, %v725
        %v734 = vmul.f32 %v710, %v726
        %v735 = vmul.f32 %v711, %v727
        %v736 = vmul.f32 %v712, %v728
        %v737 = vmul.f32 %v713, %v729
        %v738 = vmul.f32 %v714, %v730
        %v739 = vmul.f32 %v715, %v731
        %v740 = vmul.f32 %v716, %v732
        %741 = vrot.lane.b32.xlu0 %v291, 127
        %v742 = vpop.permute.xlu0 %741
        %v744 = vmul.f32 %v291, %v742
        %v745 = vperm.slane %v575, 2
        %v746 = vperm.slane %v576, 2
        %v747 = vperm.slane %v577, 2
        %v748 = vperm.slane %v578, 2
        %v749 = vperm.slane %v579, 2
        %v750 = vperm.slane %v580, 2
        %v751 = vperm.slane %v581, 2
        %v752 = vperm.slane %v582, 2
        %754 = vset.pattern.permute.xlu0 2
        %755 = vperm.xlu0 %754, %v744
        %v756 = vpop.permute.xlu0 %755
        %v758 = vadd.f32 %v745, %v756
        %v759 = vadd.f32 %v746, %v756
        %v760 = vadd.f32 %v747, %v756
        %v761 = vadd.f32 %v748, %v756
        %v762 = vadd.f32 %v749, %v756
        %v763 = vadd.f32 %v750, %v756
        %v764 = vadd.f32 %v751, %v756
        %v765 = vadd.f32 %v752, %v756
        %v766 = vsub.f32 %v758, %v733
        %v767 = vsub.f32 %v759, %v734
        %v768 = vsub.f32 %v760, %v735
        %v769 = vsub.f32 %v761, %v736
        %v770 = vsub.f32 %v762, %v737
        %v771 = vsub.f32 %v763, %v738
        %v772 = vsub.f32 %v764, %v739
        %v773 = vsub.f32 %v765, %v740
        %v774 = vrcp.pop %v766
        %v775 = vrcp.pop %v767
        %v776 = vrcp.pop %v768
        %v777 = vrcp.pop %v769
        %v778 = vrcp.pop %v770
        %v779 = vrcp.pop %v771
        %v780 = vrcp.pop %v772
        %v781 = vrcp.pop %v773
        %v782 = vmul.f32 %v766, %v774
        %v783 = vmul.f32 %v767, %v775
        %v784 = vmul.f32 %v768, %v776
        %v785 = vmul.f32 %v769, %v777
        %v786 = vmul.f32 %v770, %v778
        %v787 = vmul.f32 %v771, %v779
        %v788 = vmul.f32 %v772, %v780
        %v789 = vmul.f32 %v773, %v781
        %v790 = vsub.f32 2.0, %v782
        %v791 = vsub.f32 2.0, %v783
        %v792 = vsub.f32 2.0, %v784
        %v793 = vsub.f32 2.0, %v785
        %v794 = vsub.f32 2.0, %v786
        %v795 = vsub.f32 2.0, %v787
        %v796 = vsub.f32 2.0, %v788
        %v797 = vsub.f32 2.0, %v789
        %v798 = vmul.f32 %v774, %v790
        %v799 = vmul.f32 %v775, %v791
        %v800 = vmul.f32 %v776, %v792
        %v801 = vmul.f32 %v777, %v793
        %v802 = vmul.f32 %v778, %v794
        %v803 = vmul.f32 %v779, %v795
        %v804 = vmul.f32 %v780, %v796
        %v805 = vmul.f32 %v781, %v797
        %v806 = vmul.f32 %v733, %v798
        %v807 = vmul.f32 %v734, %v799
        %v808 = vmul.f32 %v735, %v800
        %v809 = vmul.f32 %v736, %v801
        %v810 = vmul.f32 %v737, %v802
        %v811 = vmul.f32 %v738, %v803
        %v812 = vmul.f32 %v739, %v804
        %v813 = vmul.f32 %v740, %v805
        %v814 = vlaneseq
        %v815 = vand.u32 %v814, 127
        %v816 = vadd.s32 %v815, 128
        %v817 = vadd.s32 %v815, 256
        %v818 = vadd.s32 %v815, 384
        %v819 = vadd.s32 %v815, 512
        %v820 = vadd.s32 %v815, 640
        %v821 = vadd.s32 %v815, 768
        %v822 = vadd.s32 %v815, 896
        %vm823 = vcmask 1041408
        %v824 = vsel %vm823, %v806, -inf
        %v825 = vsel %vm823, %v807, -inf
        %v826 = vsel %vm823, %v808, -inf
        %v827 = vsel %vm823, %v809, -inf
        %v828 = vsel %vm823, %v810, -inf
        %v829 = vmax.f32 %v824, %v828
        %v830 = vsel %vm823, %v811, -inf
        %v831 = vmax.f32 %v825, %v830
        %v832 = vsel %vm823, %v812, -inf
        %v833 = vmax.f32 %v826, %v832
        %v834 = vsel %vm507, %v813, -inf
        %v835 = vmax.f32 %v827, %v834
        %v836 = vmax.f32 %v829, %v831
        %v837 = vmax.f32 %v833, %v835
        %v838 = vmax.f32 %v836, %v837
        %839 = vmax.xlane.f32.xlu0 %v838
        %v840 = vpop.xlane.xlu0 %839
        %vm841 = vcmp.eq.f32.partialorder %v806, %v840
        %vm842 = vcmp.eq.f32.partialorder %v807, %v840
        %vm843 = vcmp.eq.f32.partialorder %v808, %v840
        %vm844 = vcmp.eq.f32.partialorder %v809, %v840
        %vm845 = vcmp.eq.f32.partialorder %v810, %v840
        %vm846 = vcmp.eq.f32.partialorder %v811, %v840
        %vm847 = vcmp.eq.f32.partialorder %v812, %v840
        %vm848 = vcmp.eq.f32.partialorder %v813, %v840
        %v849 = vsel %vm841, %v815, 1008
        %v850 = vsel %vm842, %v816, 1008
        %v851 = vsel %vm843, %v817, 1008
        %v852 = vsel %vm844, %v818, 1008
        %v853 = vsel %vm845, %v819, 1008
        %v854 = vsel %vm846, %v820, 1008
        %v855 = vsel %vm847, %v821, 1008
        %v856 = vsel %vm848, %v822, 1008
        %v857 = vsel %vm823, %v849, 2147483647
        %v858 = vsel %vm823, %v850, 2147483647
        %v859 = vsel %vm823, %v851, 2147483647
        %v860 = vsel %vm823, %v852, 2147483647
        %v861 = vsel %vm823, %v853, 2147483647
        %vm862 = vcmp.lt.s32.totalorder %v857, %v861
        %v863 = vsel %vm862, %v857, %v861
        %v864 = vsel %vm823, %v854, 2147483647
        %vm865 = vcmp.lt.s32.totalorder %v858, %v864
        %v866 = vsel %vm865, %v858, %v864
        %v867 = vsel %vm823, %v855, 2147483647
        %vm868 = vcmp.lt.s32.totalorder %v859, %v867
        %v869 = vsel %vm868, %v859, %v867
        %v870 = vsel %vm507, %v856, 2147483647
        %vm871 = vcmp.lt.s32.totalorder %v860, %v870
        %v872 = vsel %vm871, %v860, %v870
        %vm873 = vcmp.lt.s32.totalorder %v863, %v866
        %v874 = vsel %vm873, %v863, %v866
        %vm875 = vcmp.lt.s32.totalorder %v869, %v872
        %v876 = vsel %vm875, %v869, %v872
        %vm877 = vcmp.lt.s32.totalorder %v874, %v876
        %v878 = vsel %vm877, %v874, %v876
        %v879 = vand.u32 %v878, 65535
        %v880 = vshra.s32 %v878, 16
        %v881 = vcvt.s32.f32 %v879
        %v882 = vcvt.s32.f32 %v880
        %883 = vmin.xlane.f32.xlu0 %v882
        %v884 = vpop.xlane.xlu0 %883
        %vm885 = vcmp.eq.f32.partialorder %v882, %v884
        %v886 = vsel %vm885, %v881, inf
        %887 = vmin.xlane.f32.xlu0 %v886
        %v888 = vpop.xlane.xlu0 %887
        %v889 = vcvt.f32.s32 %v888
        %v890 = vcvt.f32.s32 %v884
        %v891 = vshll.u32 %v890, 16
        %v892 = vadd.s32 %v891, %v889
        %vm893 = vcmp.eq.s32.totalorder %v815, %v892
        %vm894 = vcmp.eq.s32.totalorder %v816, %v892
        %vm895 = vcmp.eq.s32.totalorder %v817, %v892
        %vm896 = vcmp.eq.s32.totalorder %v818, %v892
        %vm897 = vcmp.eq.s32.totalorder %v819, %v892
        %vm898 = vcmp.eq.s32.totalorder %v820, %v892
        %vm899 = vcmp.eq.s32.totalorder %v821, %v892
        %vm900 = vcmp.eq.s32.totalorder %v822, %v892
        %v901 = vsel %vm893, 1, 0
        %v902 = vsel %vm894, 1, 0
        %v903 = vsel %vm895, 1, 0
        %v904 = vsel %vm896, 1, 0
        %v905 = vsel %vm897, 1, 0
        %v906 = vsel %vm898, 1, 0
        %v907 = vsel %vm899, 1, 0
        %v908 = vsel %vm900, 1, 0
        %v909 = vcvt.s32.f32 %v901
        %v910 = vcvt.s32.f32 %v902
        %v911 = vcvt.s32.f32 %v903
        %v912 = vcvt.s32.f32 %v904
        %v913 = vcvt.s32.f32 %v905
        %v914 = vcvt.s32.f32 %v906
        %v915 = vcvt.s32.f32 %v907
        %v916 = vcvt.s32.f32 %v908
        %vm917 = vcmp.lt.f32.partialorder %v806, 0.5
        %vm918 = vcmp.lt.f32.partialorder %v807, 0.5
        %vm919 = vcmp.lt.f32.partialorder %v808, 0.5
        %vm920 = vcmp.lt.f32.partialorder %v809, 0.5
        %vm921 = vcmp.lt.f32.partialorder %v810, 0.5
        %vm922 = vcmp.lt.f32.partialorder %v811, 0.5
        %vm923 = vcmp.lt.f32.partialorder %v812, 0.5
        %vm924 = vcmp.lt.f32.partialorder %v813, 0.5
        %v925 = vsel %vm917, 1, 0
        %v926 = vsel %vm918, 1, 0
        %v927 = vsel %vm919, 1, 0
        %v928 = vsel %vm920, 1, 0
        %v929 = vsel %vm921, 1, 0
        %v930 = vsel %vm922, 1, 0
        %v931 = vsel %vm923, 1, 0
        %v932 = vsel %vm924, 1, 0
        %v933 = vcvt.s32.f32 %v925
        %v934 = vcvt.s32.f32 %v926
        %v935 = vcvt.s32.f32 %v927
        %v936 = vcvt.s32.f32 %v928
        %v937 = vcvt.s32.f32 %v929
        %v938 = vcvt.s32.f32 %v930
        %v939 = vcvt.s32.f32 %v931
        %v940 = vcvt.s32.f32 %v932
        %v941 = vperm.slane %v600, 4
        %v942 = vperm.slane %v602, 4
        %v943 = vperm.slane %v604, 4
        %v944 = vperm.slane %v606, 4
        %v945 = vperm.slane %v608, 4
        %v946 = vperm.slane %v610, 4
        %v947 = vperm.slane %v612, 4
        %v948 = vperm.slane %v614, 4
        %v949 = vmul.f32 %v933, %v941
        %v950 = vmul.f32 %v934, %v942
        %v951 = vmul.f32 %v935, %v943
        %v952 = vmul.f32 %v936, %v944
        %v953 = vmul.f32 %v937, %v945
        %v954 = vmul.f32 %v938, %v946
        %v955 = vmul.f32 %v939, %v947
        %v956 = vmul.f32 %v940, %v948
        %v957 = vsel %vm823, %v949, 0.0
        %v958 = vsel %vm823, %v950, 0.0
        %v959 = vadd.f32 %v957, %v958
        %v960 = vsel %vm823, %v951, 0.0
        %v961 = vadd.f32 %v959, %v960
        %v962 = vsel %vm823, %v952, 0.0
        %v963 = vadd.f32 %v961, %v962
        %v964 = vsel %vm823, %v953, 0.0
        %v965 = vadd.f32 %v963, %v964
        %v966 = vsel %vm823, %v954, 0.0
        %v967 = vadd.f32 %v965, %v966
        %v968 = vsel %vm823, %v955, 0.0
        %v969 = vadd.f32 %v967, %v968
        %v970 = vsel %vm507, %v956, 0.0
        %v971 = vadd.f32 %v969, %v970
        %972 = vadd.xlane.f32.xlu0 %v971
        %v973 = vpop.xlane.xlu0 %972
        %v974 = vsel %vm823, %v933, 0.0
        %v975 = vsel %vm823, %v934, 0.0
        %v976 = vadd.f32 %v974, %v975
        %v977 = vsel %vm823, %v935, 0.0
        %v978 = vadd.f32 %v976, %v977
        %v979 = vsel %vm823, %v936, 0.0
        %v980 = vadd.f32 %v978, %v979
        %v981 = vsel %vm823, %v937, 0.0
        %v982 = vadd.f32 %v980, %v981
        %v983 = vsel %vm823, %v938, 0.0
        %v984 = vadd.f32 %v982, %v983
        %v985 = vsel %vm823, %v939, 0.0
        %v986 = vadd.f32 %v984, %v985
        %v987 = vsel %vm507, %v940, 0.0
        %v988 = vadd.f32 %v986, %v987
        %989 = vadd.xlane.f32.xlu0 %v988
        %v990 = vpop.xlane.xlu0 %989
        %v991 = vrcp.pop %v990
        %v992 = vmul.f32 %v990, %v991
        %v993 = vsub.f32 2.0, %v992
        %v994 = vmul.f32 %v991, %v993
        %v995 = vmul.f32 %v973, %v994
        %1000 = vst [vmem:[#allocation1] ss:$2 sm:$0xff] %v287
        %s1001 = scalar_lea.vmem [#allocation1], 16
        %1002 = vst [vmem:[%s1001] ss:$2 sm:$0xff] %v288
        %s1003 = scalar_lea.vmem [#allocation1], 32
        %1004 = vst [vmem:[%s1003] ss:$2 sm:$0xff] %v289
        %s1005 = scalar_lea.vmem [#allocation1], 48
        %1006 = vst [vmem:[%s1005] ss:$2 sm:$0xff] %v290
        %v1007 = vld.sshfl [vmem:[#allocation1] sm:$0xff pattern:$0x75316420]
        %v1008 = vld.sshfl [vmem:[#allocation1 + $0x8] sm:$0xff pattern:$0x75316420]
        %v1009 = vld.sshfl [vmem:[#allocation1 + $0x10] sm:$0xff pattern:$0x75316420]
        %v1010 = vld.sshfl [vmem:[#allocation1 + $0x18] sm:$0xff pattern:$0x75316420]
        %v1011 = vld.sshfl [vmem:[#allocation1 + $0x20] sm:$0xff pattern:$0x75316420]
        %v1012 = vld.sshfl [vmem:[#allocation1 + $0x28] sm:$0xff pattern:$0x75316420]
        %v1013 = vld.sshfl [vmem:[#allocation1 + $0x30] sm:$0xff pattern:$0x75316420]
        %v1014 = vld.sshfl [vmem:[#allocation1 + $0x38] sm:$0xff pattern:$0x75316420]
        %vm1023 = vcmask 1043456
        %v1024 = vsel %vm1023, %v1007, %v338
        %v1025 = vsel %vm1023, %v1008, %v353
        %v1026 = vsel %vm1023, %v1009, %v368
        %v1027 = vsel %vm1023, %v1010, %v383
        %v1028 = vsel %vm1023, %v1011, %v398
        %v1029 = vsel %vm1023, %v1012, %v413
        %v1030 = vsel %vm1023, %v1013, %v428
        %v1031 = vsel %vm1023, %v1014, %v443
        %vm1032 = vcmask 916480
        %v1034 = vsel %vm1032, %v916, 0
        %v1037 = vsel %vm1032, %v1031, 0
        %1039 = vmatpush.xpose.msra.mxu0 0.0
        %1040 = vmatpush.xpose.msra.mxu0 0.0
        %1041 = vmatpush.xpose.msra.mxu0 0.0
        %1042 = vmatpush.xpose.msra.mxu0 0.0
        %1043 = vmatpush.xpose.msra.mxu0 0.0
        %1044 = vmatpush.xpose.msra.mxu0 0.0
        %1045 = vmatpush.xpose.msra.mxu0 0.0
        %1046 = vmatpush.xpose.msra.mxu0 0.0
        %1047 = vmatpush.xpose.msra.mxu0 0.0
        %1048 = vmatpush.xpose.msra.mxu0 0.0
        %1049 = vmatpush.xpose.msra.mxu0 0.0
        %1050 = vmatpush.xpose.msra.mxu0 0.0
        %1051 = vmatpush.xpose.msra.mxu0 0.0
        %1052 = vmatpush.xpose.msra.mxu0 0.0
        %1053 = vmatpush.xpose.msra.mxu0 0.0
        %1054 = vmatpush.xpose.msra.mxu0 %v1024
        %1055 = vmatmul.f32.gmra.mxu0 %v909
        %v1056 = vpop.f32.mrf.mxu0
        %v1057 = vadd.f32 0.0, %v1056
        %1058 = vdwg.mxu0
        %1059 = vmatpush.xpose.msra.mxu0 0.0
        %1060 = vmatpush.xpose.msra.mxu0 0.0
        %1061 = vmatpush.xpose.msra.mxu0 0.0
        %1062 = vmatpush.xpose.msra.mxu0 0.0
        %1063 = vmatpush.xpose.msra.mxu0 0.0
        %1064 = vmatpush.xpose.msra.mxu0 0.0
        %1065 = vmatpush.xpose.msra.mxu0 0.0
        %1066 = vmatpush.xpose.msra.mxu0 0.0
        %1067 = vmatpush.xpose.msra.mxu0 0.0
        %1068 = vmatpush.xpose.msra.mxu0 0.0
        %1069 = vmatpush.xpose.msra.mxu0 0.0
        %1070 = vmatpush.xpose.msra.mxu0 0.0
        %1071 = vmatpush.xpose.msra.mxu0 0.0
        %1072 = vmatpush.xpose.msra.mxu0 0.0
        %1073 = vmatpush.xpose.msra.mxu0 0.0
        %1074 = vmatpush.xpose.msra.mxu0 %v1025
        %1075 = vmatmul.f32.gmra.mxu0 %v910
        %v1076 = vpop.f32.mrf.mxu0
        %v1077 = vadd.f32 %v1057, %v1076
        %1078 = vdwg.mxu0
        %1079 = vmatpush.xpose.msra.mxu0 0.0
        %1080 = vmatpush.xpose.msra.mxu0 0.0
        %1081 = vmatpush.xpose.msra.mxu0 0.0
        %1082 = vmatpush.xpose.msra.mxu0 0.0
        %1083 = vmatpush.xpose.msra.mxu0 0.0
        %1084 = vmatpush.xpose.msra.mxu0 0.0
        %1085 = vmatpush.xpose.msra.mxu0 0.0
        %1086 = vmatpush.xpose.msra.mxu0 0.0
        %1087 = vmatpush.xpose.msra.mxu0 0.0
        %1088 = vmatpush.xpose.msra.mxu0 0.0
        %1089 = vmatpush.xpose.msra.mxu0 0.0
        %1090 = vmatpush.xpose.msra.mxu0 0.0
        %1091 = vmatpush.xpose.msra.mxu0 0.0
        %1092 = vmatpush.xpose.msra.mxu0 0.0
        %1093 = vmatpush.xpose.msra.mxu0 0.0
        %1094 = vmatpush.xpose.msra.mxu0 %v1026
        %1095 = vmatmul.f32.gmra.mxu0 %v911
        %v1096 = vpop.f32.mrf.mxu0
        %v1097 = vadd.f32 %v1077, %v1096
        %1098 = vdwg.mxu0
        %1099 = vmatpush.xpose.msra.mxu0 0.0
        %1100 = vmatpush.xpose.msra.mxu0 0.0
        %1101 = vmatpush.xpose.msra.mxu0 0.0
        %1102 = vmatpush.xpose.msra.mxu0 0.0
        %1103 = vmatpush.xpose.msra.mxu0 0.0
        %1104 = vmatpush.xpose.msra.mxu0 0.0
        %1105 = vmatpush.xpose.msra.mxu0 0.0
        %1106 = vmatpush.xpose.msra.mxu0 0.0
        %1107 = vmatpush.xpose.msra.mxu0 0.0
        %1108 = vmatpush.xpose.msra.mxu0 0.0
        %1109 = vmatpush.xpose.msra.mxu0 0.0
        %1110 = vmatpush.xpose.msra.mxu0 0.0
        %1111 = vmatpush.xpose.msra.mxu0 0.0
        %1112 = vmatpush.xpose.msra.mxu0 0.0
        %1113 = vmatpush.xpose.msra.mxu0 0.0
        %1114 = vmatpush.xpose.msra.mxu0 %v1027
        %1115 = vmatmul.f32.gmra.mxu0 %v912
        %v1116 = vpop.f32.mrf.mxu0
        %v1117 = vadd.f32 %v1097, %v1116
        %1118 = vdwg.mxu0
        %1119 = vmatpush.xpose.msra.mxu0 0.0
        %1120 = vmatpush.xpose.msra.mxu0 0.0
        %1121 = vmatpush.xpose.msra.mxu0 0.0
        %1122 = vmatpush.xpose.msra.mxu0 0.0
        %1123 = vmatpush.xpose.msra.mxu0 0.0
        %1124 = vmatpush.xpose.msra.mxu0 0.0
        %1125 = vmatpush.xpose.msra.mxu0 0.0
        %1126 = vmatpush.xpose.msra.mxu0 0.0
        %1127 = vmatpush.xpose.msra.mxu0 0.0
        %1128 = vmatpush.xpose.msra.mxu0 0.0
        %1129 = vmatpush.xpose.msra.mxu0 0.0
        %1130 = vmatpush.xpose.msra.mxu0 0.0
        %1131 = vmatpush.xpose.msra.mxu0 0.0
        %1132 = vmatpush.xpose.msra.mxu0 0.0
        %1133 = vmatpush.xpose.msra.mxu0 0.0
        %1134 = vmatpush.xpose.msra.mxu0 %v1028
        %1135 = vmatmul.f32.gmra.mxu0 %v913
        %v1136 = vpop.f32.mrf.mxu0
        %v1137 = vadd.f32 %v1117, %v1136
        %1138 = vdwg.mxu0
        %1139 = vmatpush.xpose.msra.mxu0 0.0
        %1140 = vmatpush.xpose.msra.mxu0 0.0
        %1141 = vmatpush.xpose.msra.mxu0 0.0
        %1142 = vmatpush.xpose.msra.mxu0 0.0
        %1143 = vmatpush.xpose.msra.mxu0 0.0
        %1144 = vmatpush.xpose.msra.mxu0 0.0
        %1145 = vmatpush.xpose.msra.mxu0 0.0
        %1146 = vmatpush.xpose.msra.mxu0 0.0
        %1147 = vmatpush.xpose.msra.mxu0 0.0
        %1148 = vmatpush.xpose.msra.mxu0 0.0
        %1149 = vmatpush.xpose.msra.mxu0 0.0
        %1150 = vmatpush.xpose.msra.mxu0 0.0
        %1151 = vmatpush.xpose.msra.mxu0 0.0
        %1152 = vmatpush.xpose.msra.mxu0 0.0
        %1153 = vmatpush.xpose.msra.mxu0 0.0
        %1154 = vmatpush.xpose.msra.mxu0 %v1029
        %1155 = vmatmul.f32.gmra.mxu0 %v914
        %v1156 = vpop.f32.mrf.mxu0
        %v1157 = vadd.f32 %v1137, %v1156
        %1158 = vdwg.mxu0
        %1159 = vmatpush.xpose.msra.mxu0 0.0
        %1160 = vmatpush.xpose.msra.mxu0 0.0
        %1161 = vmatpush.xpose.msra.mxu0 0.0
        %1162 = vmatpush.xpose.msra.mxu0 0.0
        %1163 = vmatpush.xpose.msra.mxu0 0.0
        %1164 = vmatpush.xpose.msra.mxu0 0.0
        %1165 = vmatpush.xpose.msra.mxu0 0.0
        %1166 = vmatpush.xpose.msra.mxu0 0.0
        %1167 = vmatpush.xpose.msra.mxu0 0.0
        %1168 = vmatpush.xpose.msra.mxu0 0.0
        %1169 = vmatpush.xpose.msra.mxu0 0.0
        %1170 = vmatpush.xpose.msra.mxu0 0.0
        %1171 = vmatpush.xpose.msra.mxu0 0.0
        %1172 = vmatpush.xpose.msra.mxu0 0.0
        %1173 = vmatpush.xpose.msra.mxu0 0.0
        %1174 = vmatpush.xpose.msra.mxu0 %v1030
        %1175 = vmatmul.f32.gmra.mxu0 %v915
        %v1176 = vpop.f32.mrf.mxu0
        %v1177 = vadd.f32 %v1157, %v1176
        %1178 = vdwg.mxu0
        %1179 = vmatpush.xpose.msra.mxu0 0.0
        %1180 = vmatpush.xpose.msra.mxu0 0.0
        %1181 = vmatpush.xpose.msra.mxu0 0.0
        %1182 = vmatpush.xpose.msra.mxu0 0.0
        %1183 = vmatpush.xpose.msra.mxu0 0.0
        %1184 = vmatpush.xpose.msra.mxu0 0.0
        %1185 = vmatpush.xpose.msra.mxu0 0.0
        %1186 = vmatpush.xpose.msra.mxu0 0.0
        %1187 = vmatpush.xpose.msra.mxu0 0.0
        %1188 = vmatpush.xpose.msra.mxu0 0.0
        %1189 = vmatpush.xpose.msra.mxu0 0.0
        %1190 = vmatpush.xpose.msra.mxu0 0.0
        %1191 = vmatpush.xpose.msra.mxu0 0.0
        %1192 = vmatpush.xpose.msra.mxu0 0.0
        %1193 = vmatpush.xpose.msra.mxu0 0.0
        %1194 = vmatpush.xpose.msra.mxu0 %v1037
        %1195 = vmatmul.f32.gmra.mxu0 %v1034
        %v1196 = vpop.f32.mrf.mxu0
        %v1197 = vadd.f32 %v1177, %v1196
        %1198 = vdwg.mxu0
        %vm1199 = vcmp.eq.s32.totalorder %v815, 0
        %vm1200 = vcmp.eq.s32.totalorder %v815, 1
        %vm1201 = vcmp.eq.s32.totalorder %v815, 2
        %vm1202 = vcmp.eq.s32.totalorder %v815, 3
        %1203 = vset.pattern.permute.xlu0 3
        %1204 = vperm.xlu0 %1203, %v291
        %v1205 = vpop.permute.xlu0 %1204
        %v1207 = vsel %vm1202, %v1205, 0.0
        %1208 = vset.pattern.permute.xlu0 2
        %1209 = vperm.xlu0 %1208, %v291
        %v1210 = vpop.permute.xlu0 %1209
        %v1212 = vsel %vm1201, %v1210, %v1207
        %v1213 = vsel %vm1200, %v646, %v1212
        %v1214 = vsel %vm1199, %v626, %v1213
        %vm1215 = vcmp.lt.s32.totalorder %v815, 4
        %v1216 = vsub.f32 %v1197, %v1214
        %v1217 = vmul.f32 %v1216, %v1216
        %v1218 = vsel %vm1215, %v1217, 0.0
        %vm1219 = vcmask 58368
        %v1220 = vsel %vm1219, %v1218, 0.0
        %1221 = vadd.xlane.f32.xlu0 %v1220
        %v1222 = vpop.xlane.xlu0 %1221
        %v1223 = vmul.f32 %v1222, 0.25
        %vm1224 = vcmp.eq.s32.totalorder %v815, 4
        %v1225 = vsel %vm1224, %v1197, 0.0
        %v1226 = vsel %vm1219, %v1225, 0.0
        %1227 = vadd.xlane.f32.xlu0 %v1226
        %v1228 = vpop.xlane.xlu0 %1227
        %v1229 = vadd.f32 %v1228, 1e-09
        %v1230 = vlog2.pop %v1229
        %v1231 = vmul.f32 %v1230, 0.6931472
        %vm1232 = vcmp.ge.s32.totalorder %v815, 5
        %v1233 = vsel %vm1232, %v1197, -inf
        %v1234 = vsel %vm1219, %v1233, -inf
        %1235 = vmax.xlane.f32.xlu0 %v1234
        %v1236 = vpop.xlane.xlu0 %1235
        %v1237 = vsub.f32 %v1197, %v1236
        %v1238 = vsel %vm1232, %v1237, -inf
        %v1239 = vmul.f32 %v1238, 1.442695
        %v1240 = vpow.pop %v1239
        %v1241 = vsel %vm1219, %v1240, 0.0
        %1242 = vadd.xlane.f32.xlu0 %v1241
        %v1243 = vpop.xlane.xlu0 %1242
        %v1244 = vlog2.pop %v1243
        %v1245 = vmul.f32 %v1244, 0.6931472
        %v1246 = vadd.f32 %v1236, %v1245
        %v1247 = vcvt.f32.s32.to.zero.pseudo %v291
        %v1248 = vadd.s32 %v1247, 5
        %1249 = vset.pattern.permute.xlu0 4
        %1250 = vperm.xlu0 %1249, %v1248
        %v1251 = vpop.permute.xlu0 %1250
        %vm1252 = vcmp.eq.s32.totalorder %v815, %v1251
        %v1253 = vsel %vm1252, %v1197, 0.0
        %v1254 = vsel %vm1219, %v1253, 0.0
        %1255 = vadd.xlane.f32.xlu0 %v1254
        %v1256 = vpop.xlane.xlu0 %1255
        %v1257 = vsub.f32 %v1246, %v1256
        %v1258 = vsub.f32 %v1223, %v1231
        %v1259 = vsub.f32 %v1258, %v995
        %v1260 = vsub.f32 %v1259, %v1257
        %vm1261 = vcmask 1024
        %v1262 = vsel %vm1261, %v1260, 0.0
        %1263 = vadd.xlane.f32.xlu0 %v1262
        %v1264 = vpop.xlane.xlu0 %1263
        %v1265 = vrot.slane %v1264, 4
        %v1266 = vadd.f32 %v1264, %v1265
        %v1267 = vrot.slane %v1266, 2
        %v1268 = vadd.f32 %v1266, %v1267
        %v1269 = vrot.slane %v1268, 1
        %v1270 = vadd.f32 %v1268, %v1269
        %s1271 = vtos %v1270
        %v1272 = vstv %s1271
        %1273 = vst [vmem:[%s270] sm:$0xff] %v1272
        %s1274 = sand.u32 %s127, 1
        %s1275 = scalar_lea.sflag [#allocation3], %s1274
        %s1276 = sand.u32 %s127, 1
        %s1277 = smul.addr %s1276, 64
        %s1278 = scalar_lea.vmem [#allocation2], %s1277
        %p1279 = scmp.lt.s32.totalorder %s20, 1
        %s1280 = scalar_select %p1279, %s20, 1
        %s1281 = smul.addr %s1280, 8
        %s1282 = scalar_lea.vmem %s5, %s1281
        // Predicated region
        $region37: #{yolo_loss.1} parent=35 // pred_check
          %p1283 = pneg %p137
        $region38: #{yolo_loss.1} parent=35 // pred_check_branch
          %1285 = sbr.rel (%p1283) target = $region40
        $region39: #{yolo_loss.1} parent=35 // pred_region
          %1287 = vsyncadd %s1275, 0
          %s1288 = smul.addr %s20, 8
          %s1289 = smul.addr %s1288, 8
          %s1290 = scalar_lea.hbm %s4, %s1289
          %s1292 = sshll.u32 %s1278, 4
          %s1293 = int_to_ptr.vmem [resolvable:$true] %s1292
          %s1294 = sshll.u32 %s1290, 4
          %s1295 = int_to_ptr.hbm [resolvable:$true] %s1294
          %1297 = dma.vmem_to_hbm [thread:$0]  %s1293, 1024, %s1295, %s1275
        $region40: #{yolo_loss.1} parent=35 // pred_fallthru
          _
        // Predicated region
        $region41: #{yolo_loss.1} parent=35 // pred_check
          %p1298 = pneg %p163
        $region42: #{yolo_loss.1} parent=35 // pred_check_branch
          %1300 = sbr.rel (%p1298) target = $region44
        $region43: #{yolo_loss.1} parent=35 // pred_region
          _
        $region44: #{yolo_loss.1} parent=35 // pred_fallthru
          _
      $region36: #{yolo_loss.1} parent=5 // pred_fallthru
        _
      %p1301 = scmp.le.s32.totalorder 2, %s15
      // Predicated region
      $region45: #{yolo_loss.1} parent=5 // pred_check
        %p1302 = pneg %p1301
      $region46: #{yolo_loss.1} parent=5 // pred_check_branch
        %1304 = sbr.rel (%p1302) target = $region48
      $region47: #{yolo_loss.1} parent=5 // pred_region
        %s1305 = ssub.s32 %s15, 2
        // Predicated region
        $region49: #{yolo_loss.1} parent=47 // pred_check
          %p1306 = pneg %p143
        $region50: #{yolo_loss.1} parent=47 // pred_check_branch
          %1308 = sbr.rel (%p1306) target = $region52
        $region51: #{yolo_loss.1} parent=47 // pred_region
          %s1309 = sand.u32 %s128, 1
          %s1310 = scalar_lea.sflag [#allocation3], %s1309
          %s1311 = sand.u32 %s128, 1
          %s1312 = smul.addr %s1311, 64
          %s1313 = scalar_lea.vmem [#allocation2], %s1312
          %1315 = dma.done %s1310, 1024
        $region52: #{yolo_loss.1} parent=47 // pred_fallthru
          _
        // Predicated region
        $region53: #{yolo_loss.1} parent=47 // pred_check
          %p1316 = pneg %p169
        $region54: #{yolo_loss.1} parent=47 // pred_check_branch
          %1318 = sbr.rel (%p1316) target = $region56
        $region55: #{yolo_loss.1} parent=47 // pred_region
          %p1319 = scmp.lt.s32.totalorder %s21, 1
          %s1320 = scalar_select %p1319, %s21, 1
          %s1321 = smul.addr %s1320, 8
          %s1322 = scalar_lea.vmem %s5, %s1321
        $region56: #{yolo_loss.1} parent=47 // pred_fallthru
          _
      $region48: #{yolo_loss.1} parent=5 // pred_fallthru
        _
    $region6: #{yolo_loss.1} parent=1 // loop_footer
      %s19 = sadd.s32 1, %s15
    $region7: #{yolo_loss.1} parent=1 // loop_footer_branch
      %14 = sbr.rel target = $region3
    $region8: #{yolo_loss.1} parent=1 // loop_exit
      _
    %1323 = vsyncpa [#allocation3], 1
    %s1324 = scalar_lea.sflag [#allocation3], 1
    %1325 = vsyncpa %s1324, 1

</llo_original>
